<compile_context>
chip_gen: v6e
topology: v6e:2x2x1
jax: 0.10.0
libtpu: 0.0.40
codegen_flags: <defaults>
</compile_context>

<pallas_src>
import functools
import math

import jax
import jax.numpy as jnp
from jax import lax
from jax.experimental import pallas as pl
from jax.experimental.pallas import tpu as pltpu


def _gelu_tanh(x):
    c = math.sqrt(2.0 / math.pi)
    return 0.5 * x * (1.0 + jnp.tanh(c * (x + 0.044715 * x * x * x)))


def _layer_norm(x, gamma, beta, eps=1e-5):
    mu = jnp.mean(x, axis=-1, keepdims=True)
    xc = x - mu
    var = jnp.mean(xc * xc, axis=-1, keepdims=True)
    return xc * lax.rsqrt(var + eps) * gamma + beta


def _block_kernel(x_ref, wqkv_ref, bqkv_ref, wo_ref, bo_ref,
                  g1_ref, be1_ref, wf1_ref, bf1_ref, wf2_ref, bf2_ref,
                  g2_ref, be2_ref, o_ref, *, n_heads):
    T, C = x_ref.shape                      # one batch element per grid step
    N = n_heads
    D = C // N
    mm_dtype = wqkv_ref.dtype               # MXU input dtype (f32 or bf16)

    x = x_ref[...]                          # (T, C) f32

    # ---- head-batched fused QKV projection: (N,T,C) @ (N,C,3D) -> (N,T,3D) --------
    # broadcast is hoisted (one call per invocation, never in a loop)
    xh = jnp.broadcast_to(x.astype(mm_dtype), (N, T, C))
    qkv = jnp.einsum("ntc,ncm->ntm", xh, wqkv_ref[...],
                     preferred_element_type=jnp.float32) + bqkv_ref[...]
    q = qkv[:, :, 0 * D:1 * D].astype(mm_dtype)   # scale already folded into weights
    k = qkv[:, :, 1 * D:2 * D].astype(mm_dtype)
    v = qkv[:, :, 2 * D:3 * D].astype(mm_dtype)

    # ---- additive causal mask: single (T, T) compare, generated in-kernel ---------
    row = lax.broadcasted_iota(jnp.int32, (T, T), 0)
    col = lax.broadcasted_iota(jnp.int32, (T, T), 1)
    add_mask = jnp.where(col <= row, 0.0, -1e30).astype(jnp.float32)

    # ---- head-batched attention (f32 softmax statistics) --------------------------
    scores = jnp.einsum("ntd,nsd->nts", q, k,
                        preferred_element_type=jnp.float32)
    scores = scores + add_mask[None]

    m = jnp.max(scores, axis=-1, keepdims=True)
    p = jnp.exp(scores - m)
    s = jnp.sum(p, axis=-1, keepdims=True)
    inv = pl.reciprocal(s, approx=True)            # EUP seed ...
    inv = inv * (2.0 - s * inv)                    # ... + one Newton step (~f32 acc)
    p = (p * inv).astype(mm_dtype)

    att = jnp.einsum("nts,nsd->ntd", p, v, preferred_element_type=jnp.float32)

    # head-concat folded into the output projection: per-head (T,D)@(D,C), summed
    attn_out = jnp.sum(
        jnp.einsum("ntd,ndc->ntc", att.astype(mm_dtype), wo_ref[...],
                   preferred_element_type=jnp.float32),
        axis=0) + bo_ref[...]

    # ---- residual + LN1 (f32) ------------------------------------------------------
    x1 = _layer_norm(x + attn_out, g1_ref[...], be1_ref[...])

    # ---- MLP: (T, C) @ (C, 4C) -> GELU -> (T, 4C) @ (4C, C) ------------------------
    h = jnp.dot(x1.astype(mm_dtype), wf1_ref[...],
                preferred_element_type=jnp.float32) + bf1_ref[...]
    h = _gelu_tanh(h)
    mlp_out = jnp.dot(h.astype(mm_dtype), wf2_ref[...],
                      preferred_element_type=jnp.float32) + bf2_ref[...]

    # ---- residual + LN2, store -----------------------------------------------------
    o_ref[...] = _layer_norm(x1 + mlp_out, g2_ref[...], be2_ref[...]).astype(o_ref.dtype)


def block_forward(x, wq, bq, wk, bk, wv, bv, wo, bo,
                  g1, be1, wf1, bf1, wf2, bf2, g2, be2, *,
                  n_heads, matmul_dtype=jnp.float32):
    """Block forward. x: (B, T, C) float32 -> (B, T, C) float32.

    Linear weights are stored (in, out) so y = x @ W + b (== PyTorch y = x @ W_pt.T + b).
    Set matmul_dtype=jnp.bfloat16 to feed the MXU bf16 (softmax/LN stats stay f32).
    """
    B, T, C = x.shape
    assert C % n_heads == 0
    N, D = n_heads, C // n_heads
    scale = 1.0 / math.sqrt(D)

    # ---- one-time parameter prep (in a real model: done once, not per call) --------
    def per_head_cols(w):                       # (C, C) -> (N, C, D)
        return jnp.transpose(w.reshape(C, N, D), (1, 0, 2))

    w_qkv_h = jnp.concatenate(                  # (N, C, 3D); scale folded into Q cols
        [per_head_cols(wq * scale), per_head_cols(wk), per_head_cols(wv)],
        axis=-1).astype(matmul_dtype)
    b_qkv_h = jnp.concatenate(                  # (N, 1, 3D), f32
        [(bq * scale).reshape(N, 1, D), bk.reshape(N, 1, D), bv.reshape(N, 1, D)],
        axis=-1)
    wo_h = wo.reshape(N, D, C).astype(matmul_dtype)   # (N, D, C)

    kernel = functools.partial(_block_kernel, n_heads=n_heads)

    out = pl.pallas_call(
        kernel,
        out_shape=jax.ShapeDtypeStruct((B, T, C), x.dtype),
        grid=(B,),                               # batch grid; parallel across TCs (v7x)
        in_specs=[
            pl.BlockSpec((None, T, C), lambda b: (b, 0, 0)),        # x (per-batch slab)
            # weights / LN params: constant index maps -> VMEM-resident across the grid
            pl.BlockSpec((N, C, 3 * D), lambda b: (0, 0, 0)),       # packed QKV weight
            pl.BlockSpec((N, 1, 3 * D), lambda b: (0, 0, 0)),       # packed QKV bias
            pl.BlockSpec((N, D, C), lambda b: (0, 0, 0)),           # out-proj weight
            pl.BlockSpec((1, C), lambda b: (0, 0)),                 # out-proj bias
            pl.BlockSpec((1, C), lambda b: (0, 0)),                 # ln1 gamma
            pl.BlockSpec((1, C), lambda b: (0, 0)),                 # ln1 beta
            pl.BlockSpec((C, 4 * C), lambda b: (0, 0)),             # mlp fc1 weight
            pl.BlockSpec((1, 4 * C), lambda b: (0, 0)),             # mlp fc1 bias
            pl.BlockSpec((4 * C, C), lambda b: (0, 0)),             # mlp fc2 weight
            pl.BlockSpec((1, C), lambda b: (0, 0)),                 # mlp fc2 bias
            pl.BlockSpec((1, C), lambda b: (0, 0)),                 # ln2 gamma
            pl.BlockSpec((1, C), lambda b: (0, 0)),                 # ln2 beta
        ],
        out_specs=pl.BlockSpec((None, T, C), lambda b: (b, 0, 0)),
        compiler_params=pltpu.CompilerParams(
            dimension_semantics=("parallel",)),
    )(
        x,
        w_qkv_h, b_qkv_h,
        wo_h, bo.reshape(1, C),
        g1.reshape(1, C), be1.reshape(1, C),
        wf1.astype(matmul_dtype), bf1.reshape(1, 4 * C),
        wf2.astype(matmul_dtype), bf2.reshape(1, C),
        g2.reshape(1, C), be2.reshape(1, C),
    )
    return out


def _init_linear(key, in_dim, out_dim):
    # deterministic synthetic init (PyTorch-Linear-like uniform bounds)
    kw, kb = jax.random.split(key)
    bound = 1.0 / math.sqrt(in_dim)
    w = jax.random.uniform(kw, (in_dim, out_dim), jnp.float32, -bound, bound)
    b = jax.random.uniform(kb, (out_dim,), jnp.float32, -bound, bound)
    return w, b


if __name__ == "__main__":
    # Small shapes consistent with the module: B=2, T=8, h_dim=32, n_heads=4
    B, T, C, n_heads = 2, 8, 32, 4

    key = jax.random.PRNGKey(0)
    kx, kq, kk, kv, ko, kf1, kf2, kln = jax.random.split(key, 8)

    x = jax.random.normal(kx, (B, T, C), jnp.float32)
    wq, bq = _init_linear(kq, C, C)
    wk, bk = _init_linear(kk, C, C)
    wv, bv = _init_linear(kv, C, C)
    wo, bo = _init_linear(ko, C, C)
    wf1, bf1 = _init_linear(kf1, C, 4 * C)
    wf2, bf2 = _init_linear(kf2, 4 * C, C)
    kg1, kb1, kg2, kb2 = jax.random.split(kln, 4)
    g1 = 1.0 + 0.1 * jax.random.normal(kg1, (C,), jnp.float32)
    be1 = 0.1 * jax.random.normal(kb1, (C,), jnp.float32)
    g2 = 1.0 + 0.1 * jax.random.normal(kg2, (C,), jnp.float32)
    be2 = 0.1 * jax.random.normal(kb2, (C,), jnp.float32)

    out = block_forward(x, wq, bq, wk, bk, wv, bv, wo, bo,
                        g1, be1, wf1, bf1, wf2, bf2, g2, be2, n_heads=n_heads)
    out = jax.block_until_ready(out)

    # pure-JAX reference: same math as the PyTorch Block.forward (dropout = identity,
    # tanh-GELU in both so the comparison isolates kernel numerics).
    def ref(x):
        D = C // n_heads
        q = (x @ wq + bq).reshape(B, T, n_heads, D).transpose(0, 2, 1, 3)
        k = (x @ wk + bk).reshape(B, T, n_heads, D).transpose(0, 2, 1, 3)
        v = (x @ wv + bv).reshape(B, T, n_heads, D).transpose(0, 2, 1, 3)
        w = jnp.einsum("bhtd,bhsd->bhts", q, k) / math.sqrt(D)
        causal = jnp.tril(jnp.ones((T, T), dtype=bool))
        w = jnp.where(causal[None, None, :, :], w, -jnp.inf)
        p = jax.nn.softmax(w, axis=-1)
        att = jnp.einsum("bhts,bhsd->bhtd", p, v).transpose(0, 2, 1, 3).reshape(B, T, C)
        x1 = _layer_norm(x + att @ wo + bo, g1, be1)
        h = _gelu_tanh(x1 @ wf1 + bf1)
        x2 = x1 + h @ wf2 + bf2
        return _layer_norm(x2, g2, be2)

    r = ref(x)
    err = float(jnp.max(jnp.abs(out - r)))
    assert jnp.allclose(out, r, atol=1e-3, rtol=1e-3), err
    print("KERNEL_OK")
</pallas_src>

<mosaic_0001>
module attributes {stable_mosaic.version = 11 : i64} {
  func.func @_block_kernel(%arg0: i32, %arg1: memref<1x8x32xf32, #tpu.memory_space<vmem>>, %arg2: memref<4x32x24xf32, #tpu.memory_space<vmem>>, %arg3: memref<4x1x24xf32, #tpu.memory_space<vmem>>, %arg4: memref<4x8x32xf32, #tpu.memory_space<vmem>>, %arg5: memref<1x32xf32, #tpu.memory_space<vmem>>, %arg6: memref<1x32xf32, #tpu.memory_space<vmem>>, %arg7: memref<1x32xf32, #tpu.memory_space<vmem>>, %arg8: memref<32x128xf32, #tpu.memory_space<vmem>>, %arg9: memref<1x128xf32, #tpu.memory_space<vmem>>, %arg10: memref<128x32xf32, #tpu.memory_space<vmem>>, %arg11: memref<1x32xf32, #tpu.memory_space<vmem>>, %arg12: memref<1x32xf32, #tpu.memory_space<vmem>>, %arg13: memref<1x32xf32, #tpu.memory_space<vmem>>, %arg14: memref<1x8x32xf32, #tpu.memory_space<vmem>>) attributes {dimension_semantics = [#tpu.dimension_semantics<parallel>], iteration_bounds = array<i64: 2>, scalar_prefetch = 0 : i64, scratch_operands = 0 : i64, tpu.core_type = #tpu.core_type<tc>, window_params = [{transform_indices = @transform_0, window_bounds = array<i64: 1, 8, 32>}, {pipeline_mode = #tpu.pipeline_mode<synchronous>, transform_indices = @transform_1, window_bounds = array<i64: 4, 32, 24>}, {pipeline_mode = #tpu.pipeline_mode<synchronous>, transform_indices = @transform_2, window_bounds = array<i64: 4, 1, 24>}, {pipeline_mode = #tpu.pipeline_mode<synchronous>, transform_indices = @transform_3, window_bounds = array<i64: 4, 8, 32>}, {pipeline_mode = #tpu.pipeline_mode<synchronous>, transform_indices = @transform_4, window_bounds = array<i64: 1, 32>}, {pipeline_mode = #tpu.pipeline_mode<synchronous>, transform_indices = @transform_5, window_bounds = array<i64: 1, 32>}, {pipeline_mode = #tpu.pipeline_mode<synchronous>, transform_indices = @transform_6, window_bounds = array<i64: 1, 32>}, {pipeline_mode = #tpu.pipeline_mode<synchronous>, transform_indices = @transform_7, window_bounds = array<i64: 32, 128>}, {pipeline_mode = #tpu.pipeline_mode<synchronous>, transform_indices = @transform_8, window_bounds = array<i64: 1, 128>}, {pipeline_mode = #tpu.pipeline_mode<synchronous>, transform_indices = @transform_9, window_bounds = array<i64: 128, 32>}, {pipeline_mode = #tpu.pipeline_mode<synchronous>, transform_indices = @transform_10, window_bounds = array<i64: 1, 32>}, {pipeline_mode = #tpu.pipeline_mode<synchronous>, transform_indices = @transform_11, window_bounds = array<i64: 1, 32>}, {pipeline_mode = #tpu.pipeline_mode<synchronous>, transform_indices = @transform_12, window_bounds = array<i64: 1, 32>}, {transform_indices = @transform_13, window_bounds = array<i64: 1, 8, 32>}]} {
    %c0 = arith.constant 0 : index
    %c0_0 = arith.constant 0 : index
    %c0_1 = arith.constant 0 : index
    %0 = vector.load %arg1[%c0, %c0_0, %c0_1] : memref<1x8x32xf32, #tpu.memory_space<vmem>>, vector<1x8x32xf32>
    %1 = vector.shape_cast %0 : vector<1x8x32xf32> to vector<8x32xf32>
    %2 = vector.shape_cast %1 : vector<8x32xf32> to vector<1x8x32xf32>
    %3 = vector.broadcast %2 : vector<1x8x32xf32> to vector<4x8x32xf32>
    %c0_2 = arith.constant 0 : index
    %c0_3 = arith.constant 0 : index
    %c0_4 = arith.constant 0 : index
    %4 = vector.load %arg2[%c0_2, %c0_3, %c0_4] : memref<4x32x24xf32, #tpu.memory_space<vmem>>, vector<4x32x24xf32>
    "tpu.trace_start"() <{level = 10 : i32, message = "ntc,ncm->ntm"}> : () -> ()
    %cst = arith.constant dense<0.000000e+00> : vector<4x8x24xf32>
    %5 = tpu.matmul %3, %4, %cst {dimension_numbers = #tpu.dot_dimension_numbers<[2], [1], [1], [2], [0, 0, 0, 1, 1, 2], [0], [0]>} : vector<4x8x32xf32>, vector<4x32x24xf32>, vector<4x8x24xf32> -> vector<4x8x24xf32>
    "tpu.trace_stop"() : () -> ()
    %c0_5 = arith.constant 0 : index
    %c0_6 = arith.constant 0 : index
    %c0_7 = arith.constant 0 : index
    %6 = vector.load %arg3[%c0_5, %c0_6, %c0_7] : memref<4x1x24xf32, #tpu.memory_space<vmem>>, vector<4x1x24xf32>
    %7 = vector.broadcast %6 : vector<4x1x24xf32> to vector<4x8x24xf32>
    %8 = arith.addf %5, %7 : vector<4x8x24xf32>
    %9 = vector.extract_strided_slice %8 {offsets = [0, 0, 0], sizes = [4, 8, 8], strides = [1, 1, 1]} : vector<4x8x24xf32> to vector<4x8x8xf32>
    %10 = vector.extract_strided_slice %8 {offsets = [0, 0, 8], sizes = [4, 8, 8], strides = [1, 1, 1]} : vector<4x8x24xf32> to vector<4x8x8xf32>
    %11 = vector.extract_strided_slice %8 {offsets = [0, 0, 16], sizes = [4, 8, 8], strides = [1, 1, 1]} : vector<4x8x24xf32> to vector<4x8x8xf32>
    %12 = tpu.iota {dimensions = array<i32: 0>} : vector<8x8xi32>
    %13 = tpu.iota {dimensions = array<i32: 1>} : vector<8x8xi32>
    %14 = arith.cmpi sle, %13, %12 : vector<8x8xi32>
    %cst_8 = arith.constant 0.000000e+00 : f32
    %cst_9 = arith.constant -1.000000e+30 : f32
    %15 = vector.broadcast %cst_8 : f32 to vector<8x8xf32>
    %16 = vector.broadcast %cst_9 : f32 to vector<8x8xf32>
    %17 = arith.select %14, %15, %16 : vector<8x8xi1>, vector<8x8xf32>
    "tpu.trace_start"() <{level = 10 : i32, message = "ntd,nsd->nts"}> : () -> ()
    %cst_10 = arith.constant dense<0.000000e+00> : vector<4x8x8xf32>
    %18 = tpu.matmul %9, %10, %cst_10 {dimension_numbers = #tpu.dot_dimension_numbers<[2], [2], [1], [1], [0, 0, 0, 1, 1, 1], [0], [0]>} : vector<4x8x8xf32>, vector<4x8x8xf32>, vector<4x8x8xf32> -> vector<4x8x8xf32>
    "tpu.trace_stop"() : () -> ()
    %19 = vector.shape_cast %17 : vector<8x8xf32> to vector<1x8x8xf32>
    %20 = vector.broadcast %19 : vector<1x8x8xf32> to vector<4x8x8xf32>
    %21 = arith.addf %18, %20 : vector<4x8x8xf32>
    %cst_11 = arith.constant dense<0xFF800000> : vector<4x8xf32>
    %22 = vector.multi_reduction <maximumf>, %21, %cst_11 [2] : vector<4x8x8xf32> to vector<4x8xf32>
    %23 = vector.shape_cast %22 : vector<4x8xf32> to vector<4x8x1xf32>
    %24 = vector.broadcast %23 : vector<4x8x1xf32> to vector<4x8x8xf32>
    %25 = arith.subf %21, %24 : vector<4x8x8xf32>
    %26 = math.exp %25 : vector<4x8x8xf32>
    %cst_12 = arith.constant dense<0.000000e+00> : vector<4x8xf32>
    %27 = vector.multi_reduction <add>, %26, %cst_12 [2] : vector<4x8x8xf32> to vector<4x8xf32>
    %28 = vector.shape_cast %27 : vector<4x8xf32> to vector<4x8x1xf32>
    %29 = tpu.reciprocal %28 {approx = true} : vector<4x8x1xf32> -> vector<4x8x1xf32>
    %30 = arith.mulf %28, %29 : vector<4x8x1xf32>
    %cst_13 = arith.constant 2.000000e+00 : f32
    %31 = vector.broadcast %cst_13 : f32 to vector<4x8x1xf32>
    %32 = arith.subf %31, %30 : vector<4x8x1xf32>
    %33 = arith.mulf %29, %32 : vector<4x8x1xf32>
    %34 = vector.broadcast %33 : vector<4x8x1xf32> to vector<4x8x8xf32>
    %35 = arith.mulf %26, %34 : vector<4x8x8xf32>
    "tpu.trace_start"() <{level = 10 : i32, message = "nts,nsd->ntd"}> : () -> ()
    %cst_14 = arith.constant dense<0.000000e+00> : vector<4x8x8xf32>
    %36 = tpu.matmul %35, %11, %cst_14 {dimension_numbers = #tpu.dot_dimension_numbers<[2], [1], [1], [2], [0, 0, 0, 1, 1, 2], [0], [0]>} : vector<4x8x8xf32>, vector<4x8x8xf32>, vector<4x8x8xf32> -> vector<4x8x8xf32>
    "tpu.trace_stop"() : () -> ()
    %c0_15 = arith.constant 0 : index
    %c0_16 = arith.constant 0 : index
    %c0_17 = arith.constant 0 : index
    %37 = vector.load %arg4[%c0_15, %c0_16, %c0_17] : memref<4x8x32xf32, #tpu.memory_space<vmem>>, vector<4x8x32xf32>
    "tpu.trace_start"() <{level = 10 : i32, message = "ntd,ndc->ntc"}> : () -> ()
    %cst_18 = arith.constant dense<0.000000e+00> : vector<4x8x32xf32>
    %38 = tpu.matmul %36, %37, %cst_18 {dimension_numbers = #tpu.dot_dimension_numbers<[2], [1], [1], [2], [0, 0, 0, 1, 1, 2], [0], [0]>} : vector<4x8x8xf32>, vector<4x8x32xf32>, vector<4x8x32xf32> -> vector<4x8x32xf32>
    "tpu.trace_stop"() : () -> ()
    %cst_19 = arith.constant dense<0.000000e+00> : vector<8x32xf32>
    %39 = vector.multi_reduction <add>, %38, %cst_19 [0] : vector<4x8x32xf32> to vector<8x32xf32>
    %c0_20 = arith.constant 0 : index
    %c0_21 = arith.constant 0 : index
    %40 = vector.load %arg5[%c0_20, %c0_21] : memref<1x32xf32, #tpu.memory_space<vmem>>, vector<1x32xf32>
    %41 = vector.broadcast %40 : vector<1x32xf32> to vector<8x32xf32>
    %42 = arith.addf %39, %41 : vector<8x32xf32>
    %43 = arith.addf %1, %42 : vector<8x32xf32>
    %c0_22 = arith.constant 0 : index
    %c0_23 = arith.constant 0 : index
    %44 = vector.load %arg6[%c0_22, %c0_23] : memref<1x32xf32, #tpu.memory_space<vmem>>, vector<1x32xf32>
    %c0_24 = arith.constant 0 : index
    %c0_25 = arith.constant 0 : index
    %45 = vector.load %arg7[%c0_24, %c0_25] : memref<1x32xf32, #tpu.memory_space<vmem>>, vector<1x32xf32>
    %cst_26 = arith.constant dense<0.000000e+00> : vector<8xf32>
    %46 = vector.multi_reduction <add>, %43, %cst_26 [1] : vector<8x32xf32> to vector<8xf32>
    %47 = vector.shape_cast %46 : vector<8xf32> to vector<8x1xf32>
    %cst_27 = arith.constant 3.200000e+01 : f32
    %48 = vector.broadcast %cst_27 : f32 to vector<8x1xf32>
    %49 = arith.divf %47, %48 : vector<8x1xf32>
    %50 = vector.broadcast %49 : vector<8x1xf32> to vector<8x32xf32>
    %51 = arith.subf %43, %50 : vector<8x32xf32>
    %52 = arith.mulf %51, %51 : vector<8x32xf32>
    %cst_28 = arith.constant dense<0.000000e+00> : vector<8xf32>
    %53 = vector.multi_reduction <add>, %52, %cst_28 [1] : vector<8x32xf32> to vector<8xf32>
    %54 = vector.shape_cast %53 : vector<8xf32> to vector<8x1xf32>
    %cst_29 = arith.constant 3.200000e+01 : f32
    %55 = vector.broadcast %cst_29 : f32 to vector<8x1xf32>
    %56 = arith.divf %54, %55 : vector<8x1xf32>
    %cst_30 = arith.constant 9.99999974E-6 : f32
    %57 = vector.broadcast %cst_30 : f32 to vector<8x1xf32>
    %58 = arith.addf %56, %57 : vector<8x1xf32>
    %59 = math.rsqrt %58 : vector<8x1xf32>
    %60 = vector.broadcast %59 : vector<8x1xf32> to vector<8x32xf32>
    %61 = arith.mulf %51, %60 : vector<8x32xf32>
    %62 = vector.broadcast %44 : vector<1x32xf32> to vector<8x32xf32>
    %63 = arith.mulf %61, %62 : vector<8x32xf32>
    %64 = vector.broadcast %45 : vector<1x32xf32> to vector<8x32xf32>
    %65 = arith.addf %63, %64 : vector<8x32xf32>
    %c0_31 = arith.constant 0 : index
    %c0_32 = arith.constant 0 : index
    %66 = vector.load %arg8[%c0_31, %c0_32] : memref<32x128xf32, #tpu.memory_space<vmem>>, vector<32x128xf32>
    %cst_33 = arith.constant dense<0.000000e+00> : vector<8x128xf32>
    %67 = tpu.matmul %65, %66, %cst_33 {dimension_numbers = #tpu.dot_dimension_numbers<[1], [0], [0], [1], [0, 0, 1, 1], [], []>} : vector<8x32xf32>, vector<32x128xf32>, vector<8x128xf32> -> vector<8x128xf32>
    %c0_34 = arith.constant 0 : index
    %c0_35 = arith.constant 0 : index
    %68 = vector.load %arg9[%c0_34, %c0_35] : memref<1x128xf32, #tpu.memory_space<vmem>>, vector<1x128xf32>
    %69 = vector.broadcast %68 : vector<1x128xf32> to vector<8x128xf32>
    %70 = arith.addf %67, %69 : vector<8x128xf32>
    %cst_36 = arith.constant 5.000000e-01 : f32
    %71 = vector.broadcast %cst_36 : f32 to vector<8x128xf32>
    %72 = arith.mulf %71, %70 : vector<8x128xf32>
    %cst_37 = arith.constant 4.471500e-02 : f32
    %73 = vector.broadcast %cst_37 : f32 to vector<8x128xf32>
    %74 = arith.mulf %73, %70 : vector<8x128xf32>
    %75 = arith.mulf %74, %70 : vector<8x128xf32>
    %76 = arith.mulf %75, %70 : vector<8x128xf32>
    %77 = arith.addf %70, %76 : vector<8x128xf32>
    %cst_38 = arith.constant 0.797884583 : f32
    %78 = vector.broadcast %cst_38 : f32 to vector<8x128xf32>
    %79 = arith.mulf %78, %77 : vector<8x128xf32>
    %80 = math.tanh %79 : vector<8x128xf32>
    %cst_39 = arith.constant 1.000000e+00 : f32
    %81 = vector.broadcast %cst_39 : f32 to vector<8x128xf32>
    %82 = arith.addf %81, %80 : vector<8x128xf32>
    %83 = arith.mulf %72, %82 : vector<8x128xf32>
    %c0_40 = arith.constant 0 : index
    %c0_41 = arith.constant 0 : index
    %84 = vector.load %arg10[%c0_40, %c0_41] : memref<128x32xf32, #tpu.memory_space<vmem>>, vector<128x32xf32>
    %cst_42 = arith.constant dense<0.000000e+00> : vector<8x32xf32>
    %85 = tpu.matmul %83, %84, %cst_42 {dimension_numbers = #tpu.dot_dimension_numbers<[1], [0], [0], [1], [0, 0, 1, 1], [], []>} : vector<8x128xf32>, vector<128x32xf32>, vector<8x32xf32> -> vector<8x32xf32>
    %c0_43 = arith.constant 0 : index
    %c0_44 = arith.constant 0 : index
    %86 = vector.load %arg11[%c0_43, %c0_44] : memref<1x32xf32, #tpu.memory_space<vmem>>, vector<1x32xf32>
    %87 = vector.broadcast %86 : vector<1x32xf32> to vector<8x32xf32>
    %88 = arith.addf %85, %87 : vector<8x32xf32>
    %89 = arith.addf %65, %88 : vector<8x32xf32>
    %c0_45 = arith.constant 0 : index
    %c0_46 = arith.constant 0 : index
    %90 = vector.load %arg12[%c0_45, %c0_46] : memref<1x32xf32, #tpu.memory_space<vmem>>, vector<1x32xf32>
    %c0_47 = arith.constant 0 : index
    %c0_48 = arith.constant 0 : index
    %91 = vector.load %arg13[%c0_47, %c0_48] : memref<1x32xf32, #tpu.memory_space<vmem>>, vector<1x32xf32>
    %cst_49 = arith.constant dense<0.000000e+00> : vector<8xf32>
    %92 = vector.multi_reduction <add>, %89, %cst_49 [1] : vector<8x32xf32> to vector<8xf32>
    %93 = vector.shape_cast %92 : vector<8xf32> to vector<8x1xf32>
    %cst_50 = arith.constant 3.200000e+01 : f32
    %94 = vector.broadcast %cst_50 : f32 to vector<8x1xf32>
    %95 = arith.divf %93, %94 : vector<8x1xf32>
    %96 = vector.broadcast %95 : vector<8x1xf32> to vector<8x32xf32>
    %97 = arith.subf %89, %96 : vector<8x32xf32>
    %98 = arith.mulf %97, %97 : vector<8x32xf32>
    %cst_51 = arith.constant dense<0.000000e+00> : vector<8xf32>
    %99 = vector.multi_reduction <add>, %98, %cst_51 [1] : vector<8x32xf32> to vector<8xf32>
    %100 = vector.shape_cast %99 : vector<8xf32> to vector<8x1xf32>
    %cst_52 = arith.constant 3.200000e+01 : f32
    %101 = vector.broadcast %cst_52 : f32 to vector<8x1xf32>
    %102 = arith.divf %100, %101 : vector<8x1xf32>
    %cst_53 = arith.constant 9.99999974E-6 : f32
    %103 = vector.broadcast %cst_53 : f32 to vector<8x1xf32>
    %104 = arith.addf %102, %103 : vector<8x1xf32>
    %105 = math.rsqrt %104 : vector<8x1xf32>
    %106 = vector.broadcast %105 : vector<8x1xf32> to vector<8x32xf32>
    %107 = arith.mulf %97, %106 : vector<8x32xf32>
    %108 = vector.broadcast %90 : vector<1x32xf32> to vector<8x32xf32>
    %109 = arith.mulf %107, %108 : vector<8x32xf32>
    %110 = vector.broadcast %91 : vector<1x32xf32> to vector<8x32xf32>
    %111 = arith.addf %109, %110 : vector<8x32xf32>
    %c0_54 = arith.constant 0 : index
    %c0_55 = arith.constant 0 : index
    %c0_56 = arith.constant 0 : index
    %112 = vector.load %arg14[%c0_54, %c0_55, %c0_56] : memref<1x8x32xf32, #tpu.memory_space<vmem>>, vector<1x8x32xf32>
    %113 = vector.shape_cast %112 : vector<1x8x32xf32> to vector<8x32xf32>
    %114 = vector.shape_cast %111 : vector<8x32xf32> to vector<1x8x32xf32>
    tpu.vector_store %arg14[%c0_54, %c0_55, %c0_56], %114 {strides = array<i32>} : memref<1x8x32xf32, #tpu.memory_space<vmem>>, vector<1x8x32xf32>,
    return
  }
  func.func @transform_0(%arg0: i32) -> (i32, i32, i32) {
    %c0_i32 = arith.constant 0 : i32
    %c0_i32_0 = arith.constant 0 : i32
    %c0_i32_1 = arith.constant 0 : i32
    return %arg0, %c0_i32, %c0_i32_0 : i32, i32, i32
  }
  func.func @transform_1(%arg0: i32) -> (i32, i32, i32) {
    %c0_i32 = arith.constant 0 : i32
    %c0_i32_0 = arith.constant 0 : i32
    %c0_i32_1 = arith.constant 0 : i32
    %c0_i32_2 = arith.constant 0 : i32
    return %c0_i32, %c0_i32_0, %c0_i32_1 : i32, i32, i32
  }
  func.func @transform_2(%arg0: i32) -> (i32, i32, i32) {
    %c0_i32 = arith.constant 0 : i32
    %c0_i32_0 = arith.constant 0 : i32
    %c0_i32_1 = arith.constant 0 : i32
    %c0_i32_2 = arith.constant 0 : i32
    return %c0_i32, %c0_i32_0, %c0_i32_1 : i32, i32, i32
  }
  func.func @transform_3(%arg0: i32) -> (i32, i32, i32) {
    %c0_i32 = arith.constant 0 : i32
    %c0_i32_0 = arith.constant 0 : i32
    %c0_i32_1 = arith.constant 0 : i32
    %c0_i32_2 = arith.constant 0 : i32
    return %c0_i32, %c0_i32_0, %c0_i32_1 : i32, i32, i32
  }
  func.func @transform_4(%arg0: i32) -> (i32, i32) {
    %c0_i32 = arith.constant 0 : i32
    %c0_i32_0 = arith.constant 0 : i32
    %c0_i32_1 = arith.constant 0 : i32
    return %c0_i32, %c0_i32_0 : i32, i32
  }
  func.func @transform_5(%arg0: i32) -> (i32, i32) {
    %c0_i32 = arith.constant 0 : i32
    %c0_i32_0 = arith.constant 0 : i32
    %c0_i32_1 = arith.constant 0 : i32
    return %c0_i32, %c0_i32_0 : i32, i32
  }
  func.func @transform_6(%arg0: i32) -> (i32, i32) {
    %c0_i32 = arith.constant 0 : i32
    %c0_i32_0 = arith.constant 0 : i32
    %c0_i32_1 = arith.constant 0 : i32
    return %c0_i32, %c0_i32_0 : i32, i32
  }
  func.func @transform_7(%arg0: i32) -> (i32, i32) {
    %c0_i32 = arith.constant 0 : i32
    %c0_i32_0 = arith.constant 0 : i32
    %c0_i32_1 = arith.constant 0 : i32
    return %c0_i32, %c0_i32_0 : i32, i32
  }
  func.func @transform_8(%arg0: i32) -> (i32, i32) {
    %c0_i32 = arith.constant 0 : i32
    %c0_i32_0 = arith.constant 0 : i32
    %c0_i32_1 = arith.constant 0 : i32
    return %c0_i32, %c0_i32_0 : i32, i32
  }
  func.func @transform_9(%arg0: i32) -> (i32, i32) {
    %c0_i32 = arith.constant 0 : i32
    %c0_i32_0 = arith.constant 0 : i32
    %c0_i32_1 = arith.constant 0 : i32
    return %c0_i32, %c0_i32_0 : i32, i32
  }
  func.func @transform_10(%arg0: i32) -> (i32, i32) {
    %c0_i32 = arith.constant 0 : i32
    %c0_i32_0 = arith.constant 0 : i32
    %c0_i32_1 = arith.constant 0 : i32
    return %c0_i32, %c0_i32_0 : i32, i32
  }
  func.func @transform_11(%arg0: i32) -> (i32, i32) {
    %c0_i32 = arith.constant 0 : i32
    %c0_i32_0 = arith.constant 0 : i32
    %c0_i32_1 = arith.constant 0 : i32
    return %c0_i32, %c0_i32_0 : i32, i32
  }
  func.func @transform_12(%arg0: i32) -> (i32, i32) {
    %c0_i32 = arith.constant 0 : i32
    %c0_i32_0 = arith.constant 0 : i32
    %c0_i32_1 = arith.constant 0 : i32
    return %c0_i32, %c0_i32_0 : i32, i32
  }
  func.func @transform_13(%arg0: i32) -> (i32, i32, i32) {
    %c0_i32 = arith.constant 0 : i32
    %c0_i32_0 = arith.constant 0 : i32
    %c0_i32_1 = arith.constant 0 : i32
    return %arg0, %c0_i32, %c0_i32_0 : i32, i32, i32
  }
}

</mosaic_0001>

<llo_original>
// kernel: tpu_custom_call.1
$region0: #{tpu_custom_call.1}
  #allocation0 [shape = 'u32[]', space=smem, size = 0x4, offset = 0x4, fixed_abs, tag = 'smem constant byte address 0x4 - core index']
  #allocation1 [shape = 'u32[144,128]{1,0:T(1,128)}', space=vmem, size = 0x12000, scoped, tag = 'internal scratch']
  %s0 = inlined_call_operand.vmem [shape: f32[2,8,32], index: 0, kind: input, shape index: {}]
  %s1 = inlined_call_operand.vmem [shape: f32[4,32,24], index: 1, kind: input, shape index: {}]
  %s2 = inlined_call_operand.vmem [shape: f32[4,1,24], index: 2, kind: input, shape index: {}]
  %s3 = inlined_call_operand.vmem [shape: f32[4,8,32], index: 3, kind: input, shape index: {}]
  %s4 = inlined_call_operand.vmem [shape: f32[1,32], index: 4, kind: input, shape index: {}]
  %s5 = inlined_call_operand.vmem [shape: f32[1,32], index: 5, kind: input, shape index: {}]
  %s6 = inlined_call_operand.vmem [shape: f32[1,32], index: 6, kind: input, shape index: {}]
  %s7 = inlined_call_operand.vmem [shape: f32[32,128], index: 7, kind: input, shape index: {}]
  %s8 = inlined_call_operand.vmem [shape: f32[1,128], index: 8, kind: input, shape index: {}]
  %s9 = inlined_call_operand.vmem [shape: f32[128,32], index: 9, kind: input, shape index: {}]
  %s10 = inlined_call_operand.vmem [shape: f32[1,32], index: 10, kind: input, shape index: {}]
  %s11 = inlined_call_operand.vmem [shape: f32[1,32], index: 11, kind: input, shape index: {}]
  %s12 = inlined_call_operand.vmem [shape: f32[1,32], index: 12, kind: input, shape index: {}]
  %s13 = inlined_call_operand.hbm [shape: f32[2,8,32], index: 13, kind: output, shape index: {}]
  %s14 = sld [smem:[#allocation0]]
  $region85: #{tpu_custom_call.1} parent=0
    _
  %s16 = ssub.s32 1, %s14
  %s17 = scalar_select 0, %s16, %s14
  $region1: #{tpu_custom_call.1} parent=0
    #allocation2 [shape = 'u8[8192]{0}', space=vmem, size = 0x2000, scoped, tag = 'output window, operand 0']
    #allocation3 [shape = 's32[2]{0}', space=sflag, size = 0x8, scoped, tag = 'scoped memory for tpu_custom_call.1']
    %18 = vsyncpa [#allocation3], 0
    %s19 = scalar_lea.sflag [#allocation3], 1
    %20 = vsyncpa %s19, 0
    loop: start=0, step=1, limit=4
    $region2: #{tpu_custom_call.1} parent=1 // loop_pre_header
      _
    $region3: #{tpu_custom_call.1} parent=1 // loop_header
      %s22 = sphi 0, %s26
      %p23 = scmp.ge.s32.totalorder %s22, 4
      %s32 = sphi 0, %s34
      %s35 = sphi 0, %s32
      %s36 = sphi 0, %s35
      %s52 = sphi 0, %s36
      %s56 = sphi 0, %s56
      %s58 = sphi 0, %s56
      %s59 = sphi 0, %s58
      %s73 = sphi 0, %s59
      %s77 = sphi 0, %s77
      %s79 = sphi 0, %s77
      %s80 = sphi 0, %s79
      %s94 = sphi 0, %s80
      %s98 = sphi 0, %s98
      %s100 = sphi 0, %s98
      %s101 = sphi 0, %s100
      %s115 = sphi 0, %s101
      %s119 = sphi 0, %s119
      %s121 = sphi 0, %s119
      %s122 = sphi 0, %s121
      %s136 = sphi 0, %s122
      %s140 = sphi 0, %s140
      %s142 = sphi 0, %s140
      %s143 = sphi 0, %s142
      %s157 = sphi 0, %s143
      %s161 = sphi 0, %s161
      %s163 = sphi 0, %s161
      %s164 = sphi 0, %s163
      %s178 = sphi 0, %s164
      %s182 = sphi 0, %s182
      %s184 = sphi 0, %s182
      %s185 = sphi 0, %s184
      %s199 = sphi 0, %s185
      %s203 = sphi 0, %s203
      %s205 = sphi 0, %s203
      %s206 = sphi 0, %s205
      %s220 = sphi 0, %s206
      %s224 = sphi 0, %s224
      %s226 = sphi 0, %s224
      %s227 = sphi 0, %s226
      %s241 = sphi 0, %s227
      %s245 = sphi 0, %s245
      %s247 = sphi 0, %s245
      %s248 = sphi 0, %s247
      %s262 = sphi 0, %s248
      %s266 = sphi 0, %s266
      %s268 = sphi 0, %s266
      %s269 = sphi 0, %s268
      %s283 = sphi 0, %s269
      %s287 = sphi 0, %s287
      %s289 = sphi 0, %s287
      %s290 = sphi 0, %s289
      %s304 = sphi 0, %s290
      %s310 = sphi 0, %s312
      %s313 = sphi 0, %s310
      %s314 = sphi 0, %s313
      %s330 = sphi 0, %s314
    $region4: #{tpu_custom_call.1} parent=1 // loop_header_branch
      %25 = sbr.rel (%p23) target = $region8
    $region5: #{tpu_custom_call.1} parent=1 // loop_body
      %s27 = ssub.s32 %s22, 1
      %s28 = ssub.s32 %s22, 2
      %s29 = sadd.s32 %s22, 1
      %s30 = ssub.s32 %s22, %s29
      %p31 = scmp.eq.s32.totalorder %s30, 0
      %s33 = sadd.s32 %s32, 1
      %s34 = scalar_select %p31, %s32, %s33
      %p37 = pneg %p31
      %p38 = scmp.eq.s32.totalorder %s22, 1
      %p39 = por %p37, %p38
      %p40 = scmp.ne.s32.totalorder %s32, %s35
      %p41 = scmp.eq.s32.totalorder %s22, 0
      %p42 = por %p40, %p41
      %p43 = scmp.ne.s32.totalorder %s32, %s35
      %p44 = scmp.eq.s32.totalorder %s27, 1
      %p45 = por %p43, %p44
      %p46 = scmp.ne.s32.totalorder %s35, %s36
      %p47 = scmp.eq.s32.totalorder %s27, 0
      %p48 = por %p46, %p47
      %p49 = scmp.ne.s32.totalorder %s35, %s36
      %p50 = scmp.eq.s32.totalorder %s28, 1
      %p51 = por %p49, %p50
      %p53 = scmp.ne.s32.totalorder %s36, %s52
      %p54 = scmp.eq.s32.totalorder %s28, 0
      %p55 = por %p53, %p54
      %s57 = sadd.s32 %s56, 1
      %p60 = scmp.eq.s32.totalorder %s22, 1
      %p61 = scmp.ne.s32.totalorder %s56, %s58
      %p62 = scmp.eq.s32.totalorder %s22, 0
      %p63 = por %p61, %p62
      %p64 = scmp.ne.s32.totalorder %s56, %s58
      %p65 = scmp.eq.s32.totalorder %s27, 1
      %p66 = por %p64, %p65
      %p67 = scmp.ne.s32.totalorder %s58, %s59
      %p68 = scmp.eq.s32.totalorder %s27, 0
      %p69 = por %p67, %p68
      %p70 = scmp.ne.s32.totalorder %s58, %s59
      %p71 = scmp.eq.s32.totalorder %s28, 1
      %p72 = por %p70, %p71
      %p74 = scmp.ne.s32.totalorder %s59, %s73
      %p75 = scmp.eq.s32.totalorder %s28, 0
      %p76 = por %p74, %p75
      %s78 = sadd.s32 %s77, 1
      %p81 = scmp.eq.s32.totalorder %s22, 1
      %p82 = scmp.ne.s32.totalorder %s77, %s79
      %p83 = scmp.eq.s32.totalorder %s22, 0
      %p84 = por %p82, %p83
      %p85 = scmp.ne.s32.totalorder %s77, %s79
      %p86 = scmp.eq.s32.totalorder %s27, 1
      %p87 = por %p85, %p86
      %p88 = scmp.ne.s32.totalorder %s79, %s80
      %p89 = scmp.eq.s32.totalorder %s27, 0
      %p90 = por %p88, %p89
      %p91 = scmp.ne.s32.totalorder %s79, %s80
      %p92 = scmp.eq.s32.totalorder %s28, 1
      %p93 = por %p91, %p92
      %p95 = scmp.ne.s32.totalorder %s80, %s94
      %p96 = scmp.eq.s32.totalorder %s28, 0
      %p97 = por %p95, %p96
      %s99 = sadd.s32 %s98, 1
      %p102 = scmp.eq.s32.totalorder %s22, 1
      %p103 = scmp.ne.s32.totalorder %s98, %s100
      %p104 = scmp.eq.s32.totalorder %s22, 0
      %p105 = por %p103, %p104
      %p106 = scmp.ne.s32.totalorder %s98, %s100
      %p107 = scmp.eq.s32.totalorder %s27, 1
      %p108 = por %p106, %p107
      %p109 = scmp.ne.s32.totalorder %s100, %s101
      %p110 = scmp.eq.s32.totalorder %s27, 0
      %p111 = por %p109, %p110
      %p112 = scmp.ne.s32.totalorder %s100, %s101
      %p113 = scmp.eq.s32.totalorder %s28, 1
      %p114 = por %p112, %p113
      %p116 = scmp.ne.s32.totalorder %s101, %s115
      %p117 = scmp.eq.s32.totalorder %s28, 0
      %p118 = por %p116, %p117
      %s120 = sadd.s32 %s119, 1
      %p123 = scmp.eq.s32.totalorder %s22, 1
      %p124 = scmp.ne.s32.totalorder %s119, %s121
      %p125 = scmp.eq.s32.totalorder %s22, 0
      %p126 = por %p124, %p125
      %p127 = scmp.ne.s32.totalorder %s119, %s121
      %p128 = scmp.eq.s32.totalorder %s27, 1
      %p129 = por %p127, %p128
      %p130 = scmp.ne.s32.totalorder %s121, %s122
      %p131 = scmp.eq.s32.totalorder %s27, 0
      %p132 = por %p130, %p131
      %p133 = scmp.ne.s32.totalorder %s121, %s122
      %p134 = scmp.eq.s32.totalorder %s28, 1
      %p135 = por %p133, %p134
      %p137 = scmp.ne.s32.totalorder %s122, %s136
      %p138 = scmp.eq.s32.totalorder %s28, 0
      %p139 = por %p137, %p138
      %s141 = sadd.s32 %s140, 1
      %p144 = scmp.eq.s32.totalorder %s22, 1
      %p145 = scmp.ne.s32.totalorder %s140, %s142
      %p146 = scmp.eq.s32.totalorder %s22, 0
      %p147 = por %p145, %p146
      %p148 = scmp.ne.s32.totalorder %s140, %s142
      %p149 = scmp.eq.s32.totalorder %s27, 1
      %p150 = por %p148, %p149
      %p151 = scmp.ne.s32.totalorder %s142, %s143
      %p152 = scmp.eq.s32.totalorder %s27, 0
      %p153 = por %p151, %p152
      %p154 = scmp.ne.s32.totalorder %s142, %s143
      %p155 = scmp.eq.s32.totalorder %s28, 1
      %p156 = por %p154, %p155
      %p158 = scmp.ne.s32.totalorder %s143, %s157
      %p159 = scmp.eq.s32.totalorder %s28, 0
      %p160 = por %p158, %p159
      %s162 = sadd.s32 %s161, 1
      %p165 = scmp.eq.s32.totalorder %s22, 1
      %p166 = scmp.ne.s32.totalorder %s161, %s163
      %p167 = scmp.eq.s32.totalorder %s22, 0
      %p168 = por %p166, %p167
      %p169 = scmp.ne.s32.totalorder %s161, %s163
      %p170 = scmp.eq.s32.totalorder %s27, 1
      %p171 = por %p169, %p170
      %p172 = scmp.ne.s32.totalorder %s163, %s164
      %p173 = scmp.eq.s32.totalorder %s27, 0
      %p174 = por %p172, %p173
      %p175 = scmp.ne.s32.totalorder %s163, %s164
      %p176 = scmp.eq.s32.totalorder %s28, 1
      %p177 = por %p175, %p176
      %p179 = scmp.ne.s32.totalorder %s164, %s178
      %p180 = scmp.eq.s32.totalorder %s28, 0
      %p181 = por %p179, %p180
      %s183 = sadd.s32 %s182, 1
      %p186 = scmp.eq.s32.totalorder %s22, 1
      %p187 = scmp.ne.s32.totalorder %s182, %s184
      %p188 = scmp.eq.s32.totalorder %s22, 0
      %p189 = por %p187, %p188
      %p190 = scmp.ne.s32.totalorder %s182, %s184
      %p191 = scmp.eq.s32.totalorder %s27, 1
      %p192 = por %p190, %p191
      %p193 = scmp.ne.s32.totalorder %s184, %s185
      %p194 = scmp.eq.s32.totalorder %s27, 0
      %p195 = por %p193, %p194
      %p196 = scmp.ne.s32.totalorder %s184, %s185
      %p197 = scmp.eq.s32.totalorder %s28, 1
      %p198 = por %p196, %p197
      %p200 = scmp.ne.s32.totalorder %s185, %s199
      %p201 = scmp.eq.s32.totalorder %s28, 0
      %p202 = por %p200, %p201
      %s204 = sadd.s32 %s203, 1
      %p207 = scmp.eq.s32.totalorder %s22, 1
      %p208 = scmp.ne.s32.totalorder %s203, %s205
      %p209 = scmp.eq.s32.totalorder %s22, 0
      %p210 = por %p208, %p209
      %p211 = scmp.ne.s32.totalorder %s203, %s205
      %p212 = scmp.eq.s32.totalorder %s27, 1
      %p213 = por %p211, %p212
      %p214 = scmp.ne.s32.totalorder %s205, %s206
      %p215 = scmp.eq.s32.totalorder %s27, 0
      %p216 = por %p214, %p215
      %p217 = scmp.ne.s32.totalorder %s205, %s206
      %p218 = scmp.eq.s32.totalorder %s28, 1
      %p219 = por %p217, %p218
      %p221 = scmp.ne.s32.totalorder %s206, %s220
      %p222 = scmp.eq.s32.totalorder %s28, 0
      %p223 = por %p221, %p222
      %s225 = sadd.s32 %s224, 1
      %p228 = scmp.eq.s32.totalorder %s22, 1
      %p229 = scmp.ne.s32.totalorder %s224, %s226
      %p230 = scmp.eq.s32.totalorder %s22, 0
      %p231 = por %p229, %p230
      %p232 = scmp.ne.s32.totalorder %s224, %s226
      %p233 = scmp.eq.s32.totalorder %s27, 1
      %p234 = por %p232, %p233
      %p235 = scmp.ne.s32.totalorder %s226, %s227
      %p236 = scmp.eq.s32.totalorder %s27, 0
      %p237 = por %p235, %p236
      %p238 = scmp.ne.s32.totalorder %s226, %s227
      %p239 = scmp.eq.s32.totalorder %s28, 1
      %p240 = por %p238, %p239
      %p242 = scmp.ne.s32.totalorder %s227, %s241
      %p243 = scmp.eq.s32.totalorder %s28, 0
      %p244 = por %p242, %p243
      %s246 = sadd.s32 %s245, 1
      %p249 = scmp.eq.s32.totalorder %s22, 1
      %p250 = scmp.ne.s32.totalorder %s245, %s247
      %p251 = scmp.eq.s32.totalorder %s22, 0
      %p252 = por %p250, %p251
      %p253 = scmp.ne.s32.totalorder %s245, %s247
      %p254 = scmp.eq.s32.totalorder %s27, 1
      %p255 = por %p253, %p254
      %p256 = scmp.ne.s32.totalorder %s247, %s248
      %p257 = scmp.eq.s32.totalorder %s27, 0
      %p258 = por %p256, %p257
      %p259 = scmp.ne.s32.totalorder %s247, %s248
      %p260 = scmp.eq.s32.totalorder %s28, 1
      %p261 = por %p259, %p260
      %p263 = scmp.ne.s32.totalorder %s248, %s262
      %p264 = scmp.eq.s32.totalorder %s28, 0
      %p265 = por %p263, %p264
      %s267 = sadd.s32 %s266, 1
      %p270 = scmp.eq.s32.totalorder %s22, 1
      %p271 = scmp.ne.s32.totalorder %s266, %s268
      %p272 = scmp.eq.s32.totalorder %s22, 0
      %p273 = por %p271, %p272
      %p274 = scmp.ne.s32.totalorder %s266, %s268
      %p275 = scmp.eq.s32.totalorder %s27, 1
      %p276 = por %p274, %p275
      %p277 = scmp.ne.s32.totalorder %s268, %s269
      %p278 = scmp.eq.s32.totalorder %s27, 0
      %p279 = por %p277, %p278
      %p280 = scmp.ne.s32.totalorder %s268, %s269
      %p281 = scmp.eq.s32.totalorder %s28, 1
      %p282 = por %p280, %p281
      %p284 = scmp.ne.s32.totalorder %s269, %s283
      %p285 = scmp.eq.s32.totalorder %s28, 0
      %p286 = por %p284, %p285
      %s288 = sadd.s32 %s287, 1
      %p291 = scmp.eq.s32.totalorder %s22, 1
      %p292 = scmp.ne.s32.totalorder %s287, %s289
      %p293 = scmp.eq.s32.totalorder %s22, 0
      %p294 = por %p292, %p293
      %p295 = scmp.ne.s32.totalorder %s287, %s289
      %p296 = scmp.eq.s32.totalorder %s27, 1
      %p297 = por %p295, %p296
      %p298 = scmp.ne.s32.totalorder %s289, %s290
      %p299 = scmp.eq.s32.totalorder %s27, 0
      %p300 = por %p298, %p299
      %p301 = scmp.ne.s32.totalorder %s289, %s290
      %p302 = scmp.eq.s32.totalorder %s28, 1
      %p303 = por %p301, %p302
      %p305 = scmp.ne.s32.totalorder %s290, %s304
      %p306 = scmp.eq.s32.totalorder %s28, 0
      %p307 = por %p305, %p306
      %s308 = ssub.s32 %s22, %s29
      %p309 = scmp.eq.s32.totalorder %s308, 0
      %s311 = sadd.s32 %s310, 1
      %s312 = scalar_select %p309, %s310, %s311
      %p315 = pneg %p309
      %p316 = scmp.eq.s32.totalorder %s22, 1
      %p317 = por %p315, %p316
      %p318 = scmp.ne.s32.totalorder %s310, %s313
      %p319 = scmp.eq.s32.totalorder %s22, 0
      %p320 = por %p318, %p319
      %p321 = scmp.ne.s32.totalorder %s310, %s313
      %p322 = scmp.eq.s32.totalorder %s27, 1
      %p323 = por %p321, %p322
      %p324 = scmp.ne.s32.totalorder %s313, %s314
      %p325 = scmp.eq.s32.totalorder %s27, 0
      %p326 = por %p324, %p325
      %p327 = scmp.ne.s32.totalorder %s313, %s314
      %p328 = scmp.eq.s32.totalorder %s28, 1
      %p329 = por %p327, %p328
      %p331 = scmp.ne.s32.totalorder %s314, %s330
      %p332 = scmp.eq.s32.totalorder %s28, 0
      %p333 = por %p331, %p332
      %p334 = scmp.le.s32.totalorder 1, %s22
      %p335 = scmp.lt.s32.totalorder %s22, 3
      %p336 = pnand %p334, %p335
      %p337 = pneg %p336
      // Predicated region
      $region9: #{tpu_custom_call.1} parent=5 // pred_check
        _
      $region10: #{tpu_custom_call.1} parent=5 // pred_check_branch
        %339 = sbr.rel (%p336) target = $region12
      $region11: #{tpu_custom_call.1} parent=5 // pred_region
        %s340 = ssub.s32 %s22, 1
        // Predicated region
        $region13: #{tpu_custom_call.1} parent=11 // pred_check
          %p341 = pneg %p69
        $region14: #{tpu_custom_call.1} parent=11 // pred_check_branch
          %343 = sbr.rel (%p341) target = $region16
        $region15: #{tpu_custom_call.1} parent=11 // pred_region
          _
        $region16: #{tpu_custom_call.1} parent=11 // pred_fallthru
          _
        // Predicated region
        $region17: #{tpu_custom_call.1} parent=11 // pred_check
          %p344 = pneg %p90
        $region18: #{tpu_custom_call.1} parent=11 // pred_check_branch
          %346 = sbr.rel (%p344) target = $region20
        $region19: #{tpu_custom_call.1} parent=11 // pred_region
          _
        $region20: #{tpu_custom_call.1} parent=11 // pred_fallthru
          _
        // Predicated region
        $region21: #{tpu_custom_call.1} parent=11 // pred_check
          %p347 = pneg %p111
        $region22: #{tpu_custom_call.1} parent=11 // pred_check_branch
          %349 = sbr.rel (%p347) target = $region24
        $region23: #{tpu_custom_call.1} parent=11 // pred_region
          _
        $region24: #{tpu_custom_call.1} parent=11 // pred_fallthru
          _
        // Predicated region
        $region25: #{tpu_custom_call.1} parent=11 // pred_check
          %p350 = pneg %p132
        $region26: #{tpu_custom_call.1} parent=11 // pred_check_branch
          %352 = sbr.rel (%p350) target = $region28
        $region27: #{tpu_custom_call.1} parent=11 // pred_region
          _
        $region28: #{tpu_custom_call.1} parent=11 // pred_fallthru
          _
        // Predicated region
        $region29: #{tpu_custom_call.1} parent=11 // pred_check
          %p353 = pneg %p153
        $region30: #{tpu_custom_call.1} parent=11 // pred_check_branch
          %355 = sbr.rel (%p353) target = $region32
        $region31: #{tpu_custom_call.1} parent=11 // pred_region
          _
        $region32: #{tpu_custom_call.1} parent=11 // pred_fallthru
          _
        // Predicated region
        $region33: #{tpu_custom_call.1} parent=11 // pred_check
          %p356 = pneg %p174
        $region34: #{tpu_custom_call.1} parent=11 // pred_check_branch
          %358 = sbr.rel (%p356) target = $region36
        $region35: #{tpu_custom_call.1} parent=11 // pred_region
          _
        $region36: #{tpu_custom_call.1} parent=11 // pred_fallthru
          _
        // Predicated region
        $region37: #{tpu_custom_call.1} parent=11 // pred_check
          %p359 = pneg %p195
        $region38: #{tpu_custom_call.1} parent=11 // pred_check_branch
          %361 = sbr.rel (%p359) target = $region40
        $region39: #{tpu_custom_call.1} parent=11 // pred_region
          _
        $region40: #{tpu_custom_call.1} parent=11 // pred_fallthru
          _
        // Predicated region
        $region41: #{tpu_custom_call.1} parent=11 // pred_check
          %p362 = pneg %p216
        $region42: #{tpu_custom_call.1} parent=11 // pred_check_branch
          %364 = sbr.rel (%p362) target = $region44
        $region43: #{tpu_custom_call.1} parent=11 // pred_region
          _
        $region44: #{tpu_custom_call.1} parent=11 // pred_fallthru
          _
        // Predicated region
        $region45: #{tpu_custom_call.1} parent=11 // pred_check
          %p365 = pneg %p237
        $region46: #{tpu_custom_call.1} parent=11 // pred_check_branch
          %367 = sbr.rel (%p365) target = $region48
        $region47: #{tpu_custom_call.1} parent=11 // pred_region
          _
        $region48: #{tpu_custom_call.1} parent=11 // pred_fallthru
          _
        // Predicated region
        $region49: #{tpu_custom_call.1} parent=11 // pred_check
          %p368 = pneg %p258
        $region50: #{tpu_custom_call.1} parent=11 // pred_check_branch
          %370 = sbr.rel (%p368) target = $region52
        $region51: #{tpu_custom_call.1} parent=11 // pred_region
          _
        $region52: #{tpu_custom_call.1} parent=11 // pred_fallthru
          _
        // Predicated region
        $region53: #{tpu_custom_call.1} parent=11 // pred_check
          %p371 = pneg %p279
        $region54: #{tpu_custom_call.1} parent=11 // pred_check_branch
          %373 = sbr.rel (%p371) target = $region56
        $region55: #{tpu_custom_call.1} parent=11 // pred_region
          _
        $region56: #{tpu_custom_call.1} parent=11 // pred_fallthru
          _
        // Predicated region
        $region57: #{tpu_custom_call.1} parent=11 // pred_check
          %p374 = pneg %p300
        $region58: #{tpu_custom_call.1} parent=11 // pred_check_branch
          %376 = sbr.rel (%p374) target = $region60
        $region59: #{tpu_custom_call.1} parent=11 // pred_region
          _
        $region60: #{tpu_custom_call.1} parent=11 // pred_fallthru
          _
      $region12: #{tpu_custom_call.1} parent=5 // pred_fallthru
        _
      %p377 = scmp.lt.s32.totalorder %s22, 2
      // Predicated region
      $region61: #{tpu_custom_call.1} parent=5 // pred_check
        %p378 = pneg %p377
      $region62: #{tpu_custom_call.1} parent=5 // pred_check_branch
        %380 = sbr.rel (%p378) target = $region64
      $region63: #{tpu_custom_call.1} parent=5 // pred_region
        // Predicated region
        $region65: #{tpu_custom_call.1} parent=63 // pred_check
          %p381 = pneg %p42
        $region66: #{tpu_custom_call.1} parent=63 // pred_check_branch
          %383 = sbr.rel (%p381) target = $region68
        $region67: #{tpu_custom_call.1} parent=63 // pred_region
          %p384 = scmp.lt.s32.totalorder %s22, 1
          %s385 = scalar_select %p384, %s22, 1
          %s386 = smul.addr %s385, 8
          %s387 = scalar_lea.vmem %s0, %s386
        $region68: #{tpu_custom_call.1} parent=63 // pred_fallthru
          _
      $region64: #{tpu_custom_call.1} parent=5 // pred_fallthru
        _
      %p388 = scmp.le.s32.totalorder 1, %s22
      %p389 = scmp.lt.s32.totalorder %s22, 3
      %p390 = pnand %p388, %p389
      %p391 = pneg %p390
      // Predicated region
      $region69: #{tpu_custom_call.1} parent=5 // pred_check
        _
      $region70: #{tpu_custom_call.1} parent=5 // pred_check_branch
        %393 = sbr.rel (%p390) target = $region72
      $region71: #{tpu_custom_call.1} parent=5 // pred_region
        %s394 = ssub.s32 %s22, 1
        %p395 = scmp.lt.s32.totalorder %s27, 1
        %s396 = scalar_select %p395, %s27, 1
        %s397 = smul.addr %s396, 8
        %s398 = scalar_lea.vmem %s0, %s397
        %p399 = pneg %p48
        %p400 = pneg %p45
        %p401 = pneg %p69
        %p402 = pneg %p66
        %p403 = pneg %p90
        %p404 = pneg %p87
        %p405 = pneg %p111
        %p406 = pneg %p108
        %p407 = pneg %p132
        %p408 = pneg %p129
        %p409 = pneg %p153
        %p410 = pneg %p150
        %p411 = pneg %p174
        %p412 = pneg %p171
        %p413 = pneg %p195
        %p414 = pneg %p192
        %p415 = pneg %p216
        %p416 = pneg %p213
        %p417 = pneg %p237
        %p418 = pneg %p234
        %p419 = pneg %p258
        %p420 = pneg %p255
        %p421 = pneg %p279
        %p422 = pneg %p276
        %p423 = pneg %p300
        %p424 = pneg %p297
        %p425 = pneg %p326
        %p426 = pneg %p323
        %s427 = sand.u32 %s313, 1
        %s428 = scalar_lea.sflag [#allocation3], %s427
        %s429 = sand.u32 %s313, 1
        %s430 = smul.addr %s429, 8
        %s431 = scalar_lea.vmem [#allocation2], %s430
        %p432 = scmp.lt.s32.totalorder %s27, 1
        %s433 = scalar_select %p432, %s27, 1
        %s434 = smul.addr %s433, 8
        %s435 = scalar_lea.vmem %s0, %s434
        %v436 = vld [vmem:[%s435] sm:$0xff]
        %v437 = vld [vmem:[%s1] sm:$0xff]
        %v438 = vld [vmem:[%s1 + $0x8] sm:$0xff]
        %v439 = vld [vmem:[%s1 + $0x10] sm:$0xff]
        %v440 = vld [vmem:[%s1 + $0x18] sm:$0xff]
        %v441 = vld [vmem:[%s1 + $0x20] sm:$0xff]
        %v442 = vld [vmem:[%s1 + $0x28] sm:$0xff]
        %v443 = vld [vmem:[%s1 + $0x30] sm:$0xff]
        %v444 = vld [vmem:[%s1 + $0x38] sm:$0xff]
        %v445 = vld [vmem:[%s1 + $0x40] sm:$0xff]
        %v446 = vld [vmem:[%s1 + $0x48] sm:$0xff]
        %v447 = vld [vmem:[%s1 + $0x50] sm:$0xff]
        %v448 = vld [vmem:[%s1 + $0x58] sm:$0xff]
        %v449 = vld [vmem:[%s1 + $0x60] sm:$0xff]
        %v450 = vld [vmem:[%s1 + $0x68] sm:$0xff]
        %v451 = vld [vmem:[%s1 + $0x70] sm:$0xff]
        %v452 = vld [vmem:[%s1 + $0x78] sm:$0xff]
        %v453 = vld [vmem:[%s2] sm:$0x1]
        %v454 = vld [vmem:[%s2 + $0x1] sm:$0x1]
        %v455 = vld [vmem:[%s2 + $0x2] sm:$0x1]
        %v456 = vld [vmem:[%s2 + $0x3] sm:$0x1]
        %v461 = vlaneseq
        %v462 = vshrl.u32 %v461, 7
        %v463 = vsub.s32 0, %v462
        %v464 = vrot.slane %v453, %v463
        %v465 = vlaneseq
        %v466 = vshrl.u32 %v465, 7
        %v467 = vsub.s32 0, %v466
        %v468 = vrot.slane %v454, %v467
        %v469 = vlaneseq
        %v470 = vshrl.u32 %v469, 7
        %v471 = vsub.s32 0, %v470
        %v472 = vrot.slane %v455, %v471
        %v473 = vlaneseq
        %v474 = vshrl.u32 %v473, 7
        %v475 = vsub.s32 0, %v474
        %v476 = vrot.slane %v456, %v475
        %vm481 = vcmask 261120
        %v483 = vsel %vm481, %v436, 0
        %485 = vmatprep.subr.mxu0 0.0
        %486 = vmatpush1.msra.mxu0 0.0
        %487 = vmatprep.subr.mxu0 0.0
        %488 = vmatpush1.msra.mxu0 0.0
        %489 = vmatprep.subr.mxu0 0.0
        %490 = vmatpush1.msra.mxu0 0.0
        %491 = vmatprep.subr.mxu0 0.0
        %492 = vmatpush1.msra.mxu0 0.0
        %493 = vmatprep.subr.mxu0 0.0
        %494 = vmatpush1.msra.mxu0 0.0
        %495 = vmatprep.subr.mxu0 0.0
        %496 = vmatpush1.msra.mxu0 0.0
        %497 = vmatprep.subr.mxu0 0.0
        %498 = vmatpush1.msra.mxu0 0.0
        %499 = vmatprep.subr.mxu0 0.0
        %500 = vmatpush1.msra.mxu0 0.0
        %501 = vmatprep.subr.mxu0 0.0
        %502 = vmatpush1.msra.mxu0 0.0
        %503 = vmatprep.subr.mxu0 0.0
        %504 = vmatpush1.msra.mxu0 0.0
        %505 = vmatprep.subr.mxu0 0.0
        %506 = vmatpush1.msra.mxu0 0.0
        %507 = vmatprep.subr.mxu0 0.0
        %508 = vmatpush1.msra.mxu0 0.0
        %509 = vmatprep.subr.mxu0 0.0
        %510 = vmatpush1.msra.mxu0 %v440
        %511 = vmatprep.subr.mxu0 0.0
        %512 = vmatpush1.msra.mxu0 %v439
        %513 = vmatprep.subr.mxu0 0.0
        %514 = vmatpush1.msra.mxu0 %v438
        %515 = vmatprep.subr.mxu0 0.0
        %516 = vmatpush1.msra.mxu0 %v437
        %517 = vmatprep.subr.mxu0 0.0
        %518 = vmatpush2.msra.mxu0 0.0
        %519 = vmatprep.subr.mxu0 0.0
        %520 = vmatpush2.msra.mxu0 0.0
        %521 = vmatprep.subr.mxu0 0.0
        %522 = vmatpush2.msra.mxu0 0.0
        %523 = vmatprep.subr.mxu0 0.0
        %524 = vmatpush2.msra.mxu0 0.0
        %525 = vmatprep.subr.mxu0 0.0
        %526 = vmatpush2.msra.mxu0 0.0
        %527 = vmatprep.subr.mxu0 0.0
        %528 = vmatpush2.msra.mxu0 0.0
        %529 = vmatprep.subr.mxu0 0.0
        %530 = vmatpush2.msra.mxu0 0.0
        %531 = vmatprep.subr.mxu0 0.0
        %532 = vmatpush2.msra.mxu0 0.0
        %533 = vmatprep.subr.mxu0 0.0
        %534 = vmatpush2.msra.mxu0 0.0
        %535 = vmatprep.subr.mxu0 0.0
        %536 = vmatpush2.msra.mxu0 0.0
        %537 = vmatprep.subr.mxu0 0.0
        %538 = vmatpush2.msra.mxu0 0.0
        %539 = vmatprep.subr.mxu0 0.0
        %540 = vmatpush2.msra.mxu0 0.0
        %541 = vmatprep.subr.mxu0 0.0
        %542 = vmatpush2.msra.mxu0 0.0
        %543 = vmatprep.subr.mxu0 0.0
        %544 = vmatpush2.msra.mxu0 0.0
        %545 = vmatprep.subr.mxu0 0.0
        %546 = vmatpush2.msra.mxu0 0.0
        %547 = vmatprep.subr.mxu0 0.0
        %548 = vmatpush2.msra.mxu0 0.0
        %549 = vmatprep.mubr.f32.mxu0 0.0
        %550 = vmatmul.mubr.f32.gmra.mxu0 %v483
        %v551 = vpop.f32.mrf.mxu0
        %v552 = vadd.f32 %v464, %v551
        %v553 = vpop.f32.mrf.mxu0
        %554 = vdwg.mxu0
        %555 = vmatprep.subr.mxu0 0.0
        %556 = vmatpush1.msra.mxu0 0.0
        %557 = vmatprep.subr.mxu0 0.0
        %558 = vmatpush1.msra.mxu0 0.0
        %559 = vmatprep.subr.mxu0 0.0
        %560 = vmatpush1.msra.mxu0 0.0
        %561 = vmatprep.subr.mxu0 0.0
        %562 = vmatpush1.msra.mxu0 0.0
        %563 = vmatprep.subr.mxu0 0.0
        %564 = vmatpush1.msra.mxu0 0.0
        %565 = vmatprep.subr.mxu0 0.0
        %566 = vmatpush1.msra.mxu0 0.0
        %567 = vmatprep.subr.mxu0 0.0
        %568 = vmatpush1.msra.mxu0 0.0
        %569 = vmatprep.subr.mxu0 0.0
        %570 = vmatpush1.msra.mxu0 0.0
        %571 = vmatprep.subr.mxu0 0.0
        %572 = vmatpush1.msra.mxu0 0.0
        %573 = vmatprep.subr.mxu0 0.0
        %574 = vmatpush1.msra.mxu0 0.0
        %575 = vmatprep.subr.mxu0 0.0
        %576 = vmatpush1.msra.mxu0 0.0
        %577 = vmatprep.subr.mxu0 0.0
        %578 = vmatpush1.msra.mxu0 0.0
        %579 = vmatprep.subr.mxu0 0.0
        %580 = vmatpush1.msra.mxu0 %v444
        %581 = vmatprep.subr.mxu0 0.0
        %582 = vmatpush1.msra.mxu0 %v443
        %583 = vmatprep.subr.mxu0 0.0
        %584 = vmatpush1.msra.mxu0 %v442
        %585 = vmatprep.subr.mxu0 0.0
        %586 = vmatpush1.msra.mxu0 %v441
        %587 = vmatprep.subr.mxu0 0.0
        %588 = vmatpush2.msra.mxu0 0.0
        %589 = vmatprep.subr.mxu0 0.0
        %590 = vmatpush2.msra.mxu0 0.0
        %591 = vmatprep.subr.mxu0 0.0
        %592 = vmatpush2.msra.mxu0 0.0
        %593 = vmatprep.subr.mxu0 0.0
        %594 = vmatpush2.msra.mxu0 0.0
        %595 = vmatprep.subr.mxu0 0.0
        %596 = vmatpush2.msra.mxu0 0.0
        %597 = vmatprep.subr.mxu0 0.0
        %598 = vmatpush2.msra.mxu0 0.0
        %599 = vmatprep.subr.mxu0 0.0
        %600 = vmatpush2.msra.mxu0 0.0
        %601 = vmatprep.subr.mxu0 0.0
        %602 = vmatpush2.msra.mxu0 0.0
        %603 = vmatprep.subr.mxu0 0.0
        %604 = vmatpush2.msra.mxu0 0.0
        %605 = vmatprep.subr.mxu0 0.0
        %606 = vmatpush2.msra.mxu0 0.0
        %607 = vmatprep.subr.mxu0 0.0
        %608 = vmatpush2.msra.mxu0 0.0
        %609 = vmatprep.subr.mxu0 0.0
        %610 = vmatpush2.msra.mxu0 0.0
        %611 = vmatprep.subr.mxu0 0.0
        %612 = vmatpush2.msra.mxu0 0.0
        %613 = vmatprep.subr.mxu0 0.0
        %614 = vmatpush2.msra.mxu0 0.0
        %615 = vmatprep.subr.mxu0 0.0
        %616 = vmatpush2.msra.mxu0 0.0
        %617 = vmatprep.subr.mxu0 0.0
        %618 = vmatpush2.msra.mxu0 0.0
        %619 = vmatprep.mubr.f32.mxu0 0.0
        %620 = vmatmul.mubr.f32.gmra.mxu0 %v483
        %v621 = vpop.f32.mrf.mxu0
        %v622 = vadd.f32 %v468, %v621
        %v623 = vpop.f32.mrf.mxu0
        %624 = vdwg.mxu0
        %625 = vmatprep.subr.mxu0 0.0
        %626 = vmatpush1.msra.mxu0 0.0
        %627 = vmatprep.subr.mxu0 0.0
        %628 = vmatpush1.msra.mxu0 0.0
        %629 = vmatprep.subr.mxu0 0.0
        %630 = vmatpush1.msra.mxu0 0.0
        %631 = vmatprep.subr.mxu0 0.0
        %632 = vmatpush1.msra.mxu0 0.0
        %633 = vmatprep.subr.mxu0 0.0
        %634 = vmatpush1.msra.mxu0 0.0
        %635 = vmatprep.subr.mxu0 0.0
        %636 = vmatpush1.msra.mxu0 0.0
        %637 = vmatprep.subr.mxu0 0.0
        %638 = vmatpush1.msra.mxu0 0.0
        %639 = vmatprep.subr.mxu0 0.0
        %640 = vmatpush1.msra.mxu0 0.0
        %641 = vmatprep.subr.mxu0 0.0
        %642 = vmatpush1.msra.mxu0 0.0
        %643 = vmatprep.subr.mxu0 0.0
        %644 = vmatpush1.msra.mxu0 0.0
        %645 = vmatprep.subr.mxu0 0.0
        %646 = vmatpush1.msra.mxu0 0.0
        %647 = vmatprep.subr.mxu0 0.0
        %648 = vmatpush1.msra.mxu0 0.0
        %649 = vmatprep.subr.mxu0 0.0
        %650 = vmatpush1.msra.mxu0 %v448
        %651 = vmatprep.subr.mxu0 0.0
        %652 = vmatpush1.msra.mxu0 %v447
        %653 = vmatprep.subr.mxu0 0.0
        %654 = vmatpush1.msra.mxu0 %v446
        %655 = vmatprep.subr.mxu0 0.0
        %656 = vmatpush1.msra.mxu0 %v445
        %657 = vmatprep.subr.mxu0 0.0
        %658 = vmatpush2.msra.mxu0 0.0
        %659 = vmatprep.subr.mxu0 0.0
        %660 = vmatpush2.msra.mxu0 0.0
        %661 = vmatprep.subr.mxu0 0.0
        %662 = vmatpush2.msra.mxu0 0.0
        %663 = vmatprep.subr.mxu0 0.0
        %664 = vmatpush2.msra.mxu0 0.0
        %665 = vmatprep.subr.mxu0 0.0
        %666 = vmatpush2.msra.mxu0 0.0
        %667 = vmatprep.subr.mxu0 0.0
        %668 = vmatpush2.msra.mxu0 0.0
        %669 = vmatprep.subr.mxu0 0.0
        %670 = vmatpush2.msra.mxu0 0.0
        %671 = vmatprep.subr.mxu0 0.0
        %672 = vmatpush2.msra.mxu0 0.0
        %673 = vmatprep.subr.mxu0 0.0
        %674 = vmatpush2.msra.mxu0 0.0
        %675 = vmatprep.subr.mxu0 0.0
        %676 = vmatpush2.msra.mxu0 0.0
        %677 = vmatprep.subr.mxu0 0.0
        %678 = vmatpush2.msra.mxu0 0.0
        %679 = vmatprep.subr.mxu0 0.0
        %680 = vmatpush2.msra.mxu0 0.0
        %681 = vmatprep.subr.mxu0 0.0
        %682 = vmatpush2.msra.mxu0 0.0
        %683 = vmatprep.subr.mxu0 0.0
        %684 = vmatpush2.msra.mxu0 0.0
        %685 = vmatprep.subr.mxu0 0.0
        %686 = vmatpush2.msra.mxu0 0.0
        %687 = vmatprep.subr.mxu0 0.0
        %688 = vmatpush2.msra.mxu0 0.0
        %689 = vmatprep.mubr.f32.mxu0 0.0
        %690 = vmatmul.mubr.f32.gmra.mxu0 %v483
        %v691 = vpop.f32.mrf.mxu0
        %v692 = vadd.f32 %v472, %v691
        %v693 = vpop.f32.mrf.mxu0
        %694 = vdwg.mxu0
        %695 = vmatprep.subr.mxu0 0.0
        %696 = vmatpush1.msra.mxu0 0.0
        %697 = vmatprep.subr.mxu0 0.0
        %698 = vmatpush1.msra.mxu0 0.0
        %699 = vmatprep.subr.mxu0 0.0
        %700 = vmatpush1.msra.mxu0 0.0
        %701 = vmatprep.subr.mxu0 0.0
        %702 = vmatpush1.msra.mxu0 0.0
        %703 = vmatprep.subr.mxu0 0.0
        %704 = vmatpush1.msra.mxu0 0.0
        %705 = vmatprep.subr.mxu0 0.0
        %706 = vmatpush1.msra.mxu0 0.0
        %707 = vmatprep.subr.mxu0 0.0
        %708 = vmatpush1.msra.mxu0 0.0
        %709 = vmatprep.subr.mxu0 0.0
        %710 = vmatpush1.msra.mxu0 0.0
        %711 = vmatprep.subr.mxu0 0.0
        %712 = vmatpush1.msra.mxu0 0.0
        %713 = vmatprep.subr.mxu0 0.0
        %714 = vmatpush1.msra.mxu0 0.0
        %715 = vmatprep.subr.mxu0 0.0
        %716 = vmatpush1.msra.mxu0 0.0
        %717 = vmatprep.subr.mxu0 0.0
        %718 = vmatpush1.msra.mxu0 0.0
        %719 = vmatprep.subr.mxu0 0.0
        %720 = vmatpush1.msra.mxu0 %v452
        %721 = vmatprep.subr.mxu0 0.0
        %722 = vmatpush1.msra.mxu0 %v451
        %723 = vmatprep.subr.mxu0 0.0
        %724 = vmatpush1.msra.mxu0 %v450
        %725 = vmatprep.subr.mxu0 0.0
        %726 = vmatpush1.msra.mxu0 %v449
        %727 = vmatprep.subr.mxu0 0.0
        %728 = vmatpush2.msra.mxu0 0.0
        %729 = vmatprep.subr.mxu0 0.0
        %730 = vmatpush2.msra.mxu0 0.0
        %731 = vmatprep.subr.mxu0 0.0
        %732 = vmatpush2.msra.mxu0 0.0
        %733 = vmatprep.subr.mxu0 0.0
        %734 = vmatpush2.msra.mxu0 0.0
        %735 = vmatprep.subr.mxu0 0.0
        %736 = vmatpush2.msra.mxu0 0.0
        %737 = vmatprep.subr.mxu0 0.0
        %738 = vmatpush2.msra.mxu0 0.0
        %739 = vmatprep.subr.mxu0 0.0
        %740 = vmatpush2.msra.mxu0 0.0
        %741 = vmatprep.subr.mxu0 0.0
        %742 = vmatpush2.msra.mxu0 0.0
        %743 = vmatprep.subr.mxu0 0.0
        %744 = vmatpush2.msra.mxu0 0.0
        %745 = vmatprep.subr.mxu0 0.0
        %746 = vmatpush2.msra.mxu0 0.0
        %747 = vmatprep.subr.mxu0 0.0
        %748 = vmatpush2.msra.mxu0 0.0
        %749 = vmatprep.subr.mxu0 0.0
        %750 = vmatpush2.msra.mxu0 0.0
        %751 = vmatprep.subr.mxu0 0.0
        %752 = vmatpush2.msra.mxu0 0.0
        %753 = vmatprep.subr.mxu0 0.0
        %754 = vmatpush2.msra.mxu0 0.0
        %755 = vmatprep.subr.mxu0 0.0
        %756 = vmatpush2.msra.mxu0 0.0
        %757 = vmatprep.subr.mxu0 0.0
        %758 = vmatpush2.msra.mxu0 0.0
        %759 = vmatprep.mubr.f32.mxu0 0.0
        %760 = vmatmul.mubr.f32.gmra.mxu0 %v483
        %v761 = vpop.f32.mrf.mxu0
        %v762 = vadd.f32 %v476, %v761
        %v763 = vpop.f32.mrf.mxu0
        %764 = vdwg.mxu0
        %v765 = vlaneseq
        %v766 = vshrl.u32 %v765, 7
        %v767 = vlaneseq
        %v768 = vand.u32 %v767, 127
        %vm769 = vcmp.le.s32.totalorder %v768, %v766
        %v770 = vsel %vm769, 0.0, -1e+30
        %772 = vrot.lane.b32.xlu0 %v552, 120
        %v773 = vpop.permute.xlu0 %772
        %vm774 = vcmask 64512
        %v775 = vsel %vm774, %v552, 0
        %v777 = vsel %vm774, %v773, 0
        %779 = vmatprep.subr.mxu0 0.0
        %780 = vmatpush1.xpose.msra.mxu0 0.0
        %781 = vmatprep.subr.mxu0 0.0
        %782 = vmatpush1.xpose.msra.mxu0 0.0
        %783 = vmatprep.subr.mxu0 0.0
        %784 = vmatpush1.xpose.msra.mxu0 0.0
        %785 = vmatprep.subr.mxu0 0.0
        %786 = vmatpush1.xpose.msra.mxu0 0.0
        %787 = vmatprep.subr.mxu0 0.0
        %788 = vmatpush1.xpose.msra.mxu0 0.0
        %789 = vmatprep.subr.mxu0 0.0
        %790 = vmatpush1.xpose.msra.mxu0 0.0
        %791 = vmatprep.subr.mxu0 0.0
        %792 = vmatpush1.xpose.msra.mxu0 0.0
        %793 = vmatprep.subr.mxu0 0.0
        %794 = vmatpush1.xpose.msra.mxu0 0.0
        %795 = vmatprep.subr.mxu0 0.0
        %796 = vmatpush1.xpose.msra.mxu0 0.0
        %797 = vmatprep.subr.mxu0 0.0
        %798 = vmatpush1.xpose.msra.mxu0 0.0
        %799 = vmatprep.subr.mxu0 0.0
        %800 = vmatpush1.xpose.msra.mxu0 0.0
        %801 = vmatprep.subr.mxu0 0.0
        %802 = vmatpush1.xpose.msra.mxu0 0.0
        %803 = vmatprep.subr.mxu0 0.0
        %804 = vmatpush1.xpose.msra.mxu0 0.0
        %805 = vmatprep.subr.mxu0 0.0
        %806 = vmatpush1.xpose.msra.mxu0 0.0
        %807 = vmatprep.subr.mxu0 0.0
        %808 = vmatpush1.xpose.msra.mxu0 0.0
        %809 = vmatprep.subr.mxu0 0.0
        %810 = vmatpush1.xpose.msra.mxu0 %v777
        %811 = vmatprep.subr.mxu0 0.0
        %812 = vmatpush2.xpose.msra.mxu0 0.0
        %813 = vmatprep.subr.mxu0 0.0
        %814 = vmatpush2.xpose.msra.mxu0 0.0
        %815 = vmatprep.subr.mxu0 0.0
        %816 = vmatpush2.xpose.msra.mxu0 0.0
        %817 = vmatprep.subr.mxu0 0.0
        %818 = vmatpush2.xpose.msra.mxu0 0.0
        %819 = vmatprep.subr.mxu0 0.0
        %820 = vmatpush2.xpose.msra.mxu0 0.0
        %821 = vmatprep.subr.mxu0 0.0
        %822 = vmatpush2.xpose.msra.mxu0 0.0
        %823 = vmatprep.subr.mxu0 0.0
        %824 = vmatpush2.xpose.msra.mxu0 0.0
        %825 = vmatprep.subr.mxu0 0.0
        %826 = vmatpush2.xpose.msra.mxu0 0.0
        %827 = vmatprep.subr.mxu0 0.0
        %828 = vmatpush2.xpose.msra.mxu0 0.0
        %829 = vmatprep.subr.mxu0 0.0
        %830 = vmatpush2.xpose.msra.mxu0 0.0
        %831 = vmatprep.subr.mxu0 0.0
        %832 = vmatpush2.xpose.msra.mxu0 0.0
        %833 = vmatprep.subr.mxu0 0.0
        %834 = vmatpush2.xpose.msra.mxu0 0.0
        %835 = vmatprep.subr.mxu0 0.0
        %836 = vmatpush2.xpose.msra.mxu0 0.0
        %837 = vmatprep.subr.mxu0 0.0
        %838 = vmatpush2.xpose.msra.mxu0 0.0
        %839 = vmatprep.subr.mxu0 0.0
        %840 = vmatpush2.xpose.msra.mxu0 0.0
        %841 = vmatprep.subr.mxu0 0.0
        %842 = vmatpush2.xpose.msra.mxu0 0.0
        %843 = vmatprep.mubr.f32.mxu0 0.0
        %844 = vmatmul.mubr.f32.gmra.mxu0 %v775
        %v845 = vpop.f32.mrf.mxu0
        %v846 = vadd.f32 %v770, %v845
        %v847 = vpop.f32.mrf.mxu0
        %848 = vdwg.mxu0
        %850 = vrot.lane.b32.xlu0 %v622, 120
        %v851 = vpop.permute.xlu0 %850
        %v852 = vsel %vm774, %v622, 0
        %v854 = vsel %vm774, %v851, 0
        %856 = vmatprep.subr.mxu0 0.0
        %857 = vmatpush1.xpose.msra.mxu0 0.0
        %858 = vmatprep.subr.mxu0 0.0
        %859 = vmatpush1.xpose.msra.mxu0 0.0
        %860 = vmatprep.subr.mxu0 0.0
        %861 = vmatpush1.xpose.msra.mxu0 0.0
        %862 = vmatprep.subr.mxu0 0.0
        %863 = vmatpush1.xpose.msra.mxu0 0.0
        %864 = vmatprep.subr.mxu0 0.0
        %865 = vmatpush1.xpose.msra.mxu0 0.0
        %866 = vmatprep.subr.mxu0 0.0
        %867 = vmatpush1.xpose.msra.mxu0 0.0
        %868 = vmatprep.subr.mxu0 0.0
        %869 = vmatpush1.xpose.msra.mxu0 0.0
        %870 = vmatprep.subr.mxu0 0.0
        %871 = vmatpush1.xpose.msra.mxu0 0.0
        %872 = vmatprep.subr.mxu0 0.0
        %873 = vmatpush1.xpose.msra.mxu0 0.0
        %874 = vmatprep.subr.mxu0 0.0
        %875 = vmatpush1.xpose.msra.mxu0 0.0
        %876 = vmatprep.subr.mxu0 0.0
        %877 = vmatpush1.xpose.msra.mxu0 0.0
        %878 = vmatprep.subr.mxu0 0.0
        %879 = vmatpush1.xpose.msra.mxu0 0.0
        %880 = vmatprep.subr.mxu0 0.0
        %881 = vmatpush1.xpose.msra.mxu0 0.0
        %882 = vmatprep.subr.mxu0 0.0
        %883 = vmatpush1.xpose.msra.mxu0 0.0
        %884 = vmatprep.subr.mxu0 0.0
        %885 = vmatpush1.xpose.msra.mxu0 0.0
        %886 = vmatprep.subr.mxu0 0.0
        %887 = vmatpush1.xpose.msra.mxu0 %v854
        %888 = vmatprep.subr.mxu0 0.0
        %889 = vmatpush2.xpose.msra.mxu0 0.0
        %890 = vmatprep.subr.mxu0 0.0
        %891 = vmatpush2.xpose.msra.mxu0 0.0
        %892 = vmatprep.subr.mxu0 0.0
        %893 = vmatpush2.xpose.msra.mxu0 0.0
        %894 = vmatprep.subr.mxu0 0.0
        %895 = vmatpush2.xpose.msra.mxu0 0.0
        %896 = vmatprep.subr.mxu0 0.0
        %897 = vmatpush2.xpose.msra.mxu0 0.0
        %898 = vmatprep.subr.mxu0 0.0
        %899 = vmatpush2.xpose.msra.mxu0 0.0
        %900 = vmatprep.subr.mxu0 0.0
        %901 = vmatpush2.xpose.msra.mxu0 0.0
        %902 = vmatprep.subr.mxu0 0.0
        %903 = vmatpush2.xpose.msra.mxu0 0.0
        %904 = vmatprep.subr.mxu0 0.0
        %905 = vmatpush2.xpose.msra.mxu0 0.0
        %906 = vmatprep.subr.mxu0 0.0
        %907 = vmatpush2.xpose.msra.mxu0 0.0
        %908 = vmatprep.subr.mxu0 0.0
        %909 = vmatpush2.xpose.msra.mxu0 0.0
        %910 = vmatprep.subr.mxu0 0.0
        %911 = vmatpush2.xpose.msra.mxu0 0.0
        %912 = vmatprep.subr.mxu0 0.0
        %913 = vmatpush2.xpose.msra.mxu0 0.0
        %914 = vmatprep.subr.mxu0 0.0
        %915 = vmatpush2.xpose.msra.mxu0 0.0
        %916 = vmatprep.subr.mxu0 0.0
        %917 = vmatpush2.xpose.msra.mxu0 0.0
        %918 = vmatprep.subr.mxu0 0.0
        %919 = vmatpush2.xpose.msra.mxu0 0.0
        %920 = vmatprep.mubr.f32.mxu0 0.0
        %921 = vmatmul.mubr.f32.gmra.mxu0 %v852
        %v922 = vpop.f32.mrf.mxu0
        %v923 = vadd.f32 %v770, %v922
        %v924 = vpop.f32.mrf.mxu0
        %925 = vdwg.mxu0
        %927 = vrot.lane.b32.xlu0 %v692, 120
        %v928 = vpop.permute.xlu0 %927
        %v929 = vsel %vm774, %v692, 0
        %v931 = vsel %vm774, %v928, 0
        %933 = vmatprep.subr.mxu0 0.0
        %934 = vmatpush1.xpose.msra.mxu0 0.0
        %935 = vmatprep.subr.mxu0 0.0
        %936 = vmatpush1.xpose.msra.mxu0 0.0
        %937 = vmatprep.subr.mxu0 0.0
        %938 = vmatpush1.xpose.msra.mxu0 0.0
        %939 = vmatprep.subr.mxu0 0.0
        %940 = vmatpush1.xpose.msra.mxu0 0.0
        %941 = vmatprep.subr.mxu0 0.0
        %942 = vmatpush1.xpose.msra.mxu0 0.0
        %943 = vmatprep.subr.mxu0 0.0
        %944 = vmatpush1.xpose.msra.mxu0 0.0
        %945 = vmatprep.subr.mxu0 0.0
        %946 = vmatpush1.xpose.msra.mxu0 0.0
        %947 = vmatprep.subr.mxu0 0.0
        %948 = vmatpush1.xpose.msra.mxu0 0.0
        %949 = vmatprep.subr.mxu0 0.0
        %950 = vmatpush1.xpose.msra.mxu0 0.0
        %951 = vmatprep.subr.mxu0 0.0
        %952 = vmatpush1.xpose.msra.mxu0 0.0
        %953 = vmatprep.subr.mxu0 0.0
        %954 = vmatpush1.xpose.msra.mxu0 0.0
        %955 = vmatprep.subr.mxu0 0.0
        %956 = vmatpush1.xpose.msra.mxu0 0.0
        %957 = vmatprep.subr.mxu0 0.0
        %958 = vmatpush1.xpose.msra.mxu0 0.0
        %959 = vmatprep.subr.mxu0 0.0
        %960 = vmatpush1.xpose.msra.mxu0 0.0
        %961 = vmatprep.subr.mxu0 0.0
        %962 = vmatpush1.xpose.msra.mxu0 0.0
        %963 = vmatprep.subr.mxu0 0.0
        %964 = vmatpush1.xpose.msra.mxu0 %v931
        %965 = vmatprep.subr.mxu0 0.0
        %966 = vmatpush2.xpose.msra.mxu0 0.0
        %967 = vmatprep.subr.mxu0 0.0
        %968 = vmatpush2.xpose.msra.mxu0 0.0
        %969 = vmatprep.subr.mxu0 0.0
        %970 = vmatpush2.xpose.msra.mxu0 0.0
        %971 = vmatprep.subr.mxu0 0.0
        %972 = vmatpush2.xpose.msra.mxu0 0.0
        %973 = vmatprep.subr.mxu0 0.0
        %974 = vmatpush2.xpose.msra.mxu0 0.0
        %975 = vmatprep.subr.mxu0 0.0
        %976 = vmatpush2.xpose.msra.mxu0 0.0
        %977 = vmatprep.subr.mxu0 0.0
        %978 = vmatpush2.xpose.msra.mxu0 0.0
        %979 = vmatprep.subr.mxu0 0.0
        %980 = vmatpush2.xpose.msra.mxu0 0.0
        %981 = vmatprep.subr.mxu0 0.0
        %982 = vmatpush2.xpose.msra.mxu0 0.0
        %983 = vmatprep.subr.mxu0 0.0
        %984 = vmatpush2.xpose.msra.mxu0 0.0
        %985 = vmatprep.subr.mxu0 0.0
        %986 = vmatpush2.xpose.msra.mxu0 0.0
        %987 = vmatprep.subr.mxu0 0.0
        %988 = vmatpush2.xpose.msra.mxu0 0.0
        %989 = vmatprep.subr.mxu0 0.0
        %990 = vmatpush2.xpose.msra.mxu0 0.0
        %991 = vmatprep.subr.mxu0 0.0
        %992 = vmatpush2.xpose.msra.mxu0 0.0
        %993 = vmatprep.subr.mxu0 0.0
        %994 = vmatpush2.xpose.msra.mxu0 0.0
        %995 = vmatprep.subr.mxu0 0.0
        %996 = vmatpush2.xpose.msra.mxu0 0.0
        %997 = vmatprep.mubr.f32.mxu0 0.0
        %998 = vmatmul.mubr.f32.gmra.mxu0 %v929
        %v999 = vpop.f32.mrf.mxu0
        %v1000 = vadd.f32 %v770, %v999
        %v1001 = vpop.f32.mrf.mxu0
        %1002 = vdwg.mxu0
        %1004 = vrot.lane.b32.xlu0 %v762, 120
        %v1005 = vpop.permute.xlu0 %1004
        %v1006 = vsel %vm774, %v762, 0
        %v1008 = vsel %vm774, %v1005, 0
        %1010 = vmatprep.subr.mxu0 0.0
        %1011 = vmatpush1.xpose.msra.mxu0 0.0
        %1012 = vmatprep.subr.mxu0 0.0
        %1013 = vmatpush1.xpose.msra.mxu0 0.0
        %1014 = vmatprep.subr.mxu0 0.0
        %1015 = vmatpush1.xpose.msra.mxu0 0.0
        %1016 = vmatprep.subr.mxu0 0.0
        %1017 = vmatpush1.xpose.msra.mxu0 0.0
        %1018 = vmatprep.subr.mxu0 0.0
        %1019 = vmatpush1.xpose.msra.mxu0 0.0
        %1020 = vmatprep.subr.mxu0 0.0
        %1021 = vmatpush1.xpose.msra.mxu0 0.0
        %1022 = vmatprep.subr.mxu0 0.0
        %1023 = vmatpush1.xpose.msra.mxu0 0.0
        %1024 = vmatprep.subr.mxu0 0.0
        %1025 = vmatpush1.xpose.msra.mxu0 0.0
        %1026 = vmatprep.subr.mxu0 0.0
        %1027 = vmatpush1.xpose.msra.mxu0 0.0
        %1028 = vmatprep.subr.mxu0 0.0
        %1029 = vmatpush1.xpose.msra.mxu0 0.0
        %1030 = vmatprep.subr.mxu0 0.0
        %1031 = vmatpush1.xpose.msra.mxu0 0.0
        %1032 = vmatprep.subr.mxu0 0.0
        %1033 = vmatpush1.xpose.msra.mxu0 0.0
        %1034 = vmatprep.subr.mxu0 0.0
        %1035 = vmatpush1.xpose.msra.mxu0 0.0
        %1036 = vmatprep.subr.mxu0 0.0
        %1037 = vmatpush1.xpose.msra.mxu0 0.0
        %1038 = vmatprep.subr.mxu0 0.0
        %1039 = vmatpush1.xpose.msra.mxu0 0.0
        %1040 = vmatprep.subr.mxu0 0.0
        %1041 = vmatpush1.xpose.msra.mxu0 %v1008
        %1042 = vmatprep.subr.mxu0 0.0
        %1043 = vmatpush2.xpose.msra.mxu0 0.0
        %1044 = vmatprep.subr.mxu0 0.0
        %1045 = vmatpush2.xpose.msra.mxu0 0.0
        %1046 = vmatprep.subr.mxu0 0.0
        %1047 = vmatpush2.xpose.msra.mxu0 0.0
        %1048 = vmatprep.subr.mxu0 0.0
        %1049 = vmatpush2.xpose.msra.mxu0 0.0
        %1050 = vmatprep.subr.mxu0 0.0
        %1051 = vmatpush2.xpose.msra.mxu0 0.0
        %1052 = vmatprep.subr.mxu0 0.0
        %1053 = vmatpush2.xpose.msra.mxu0 0.0
        %1054 = vmatprep.subr.mxu0 0.0
        %1055 = vmatpush2.xpose.msra.mxu0 0.0
        %1056 = vmatprep.subr.mxu0 0.0
        %1057 = vmatpush2.xpose.msra.mxu0 0.0
        %1058 = vmatprep.subr.mxu0 0.0
        %1059 = vmatpush2.xpose.msra.mxu0 0.0
        %1060 = vmatprep.subr.mxu0 0.0
        %1061 = vmatpush2.xpose.msra.mxu0 0.0
        %1062 = vmatprep.subr.mxu0 0.0
        %1063 = vmatpush2.xpose.msra.mxu0 0.0
        %1064 = vmatprep.subr.mxu0 0.0
        %1065 = vmatpush2.xpose.msra.mxu0 0.0
        %1066 = vmatprep.subr.mxu0 0.0
        %1067 = vmatpush2.xpose.msra.mxu0 0.0
        %1068 = vmatprep.subr.mxu0 0.0
        %1069 = vmatpush2.xpose.msra.mxu0 0.0
        %1070 = vmatprep.subr.mxu0 0.0
        %1071 = vmatpush2.xpose.msra.mxu0 0.0
        %1072 = vmatprep.subr.mxu0 0.0
        %1073 = vmatpush2.xpose.msra.mxu0 0.0
        %1074 = vmatprep.mubr.f32.mxu0 0.0
        %1075 = vmatmul.mubr.f32.gmra.mxu0 %v1006
        %v1076 = vpop.f32.mrf.mxu0
        %v1077 = vadd.f32 %v770, %v1076
        %v1078 = vpop.f32.mrf.mxu0
        %1079 = vdwg.mxu0
        %v1080 = vsel %vm774, %v846, -inf
        %1081 = vmax.xlane.f32.xlu0 %v1080
        %v1082 = vpop.xlane.xlu0 %1081
        %v1083 = vsel %vm774, %v923, -inf
        %1084 = vmax.xlane.f32.xlu0 %v1083
        %v1085 = vpop.xlane.xlu0 %1084
        %v1086 = vsel %vm774, %v1000, -inf
        %1087 = vmax.xlane.f32.xlu0 %v1086
        %v1088 = vpop.xlane.xlu0 %1087
        %v1089 = vsel %vm774, %v1077, -inf
        %1090 = vmax.xlane.f32.xlu0 %v1089
        %v1091 = vpop.xlane.xlu0 %1090
        %v1092 = vsub.f32 %v846, %v1082
        %v1093 = vsub.f32 %v923, %v1085
        %v1094 = vsub.f32 %v1000, %v1088
        %v1095 = vsub.f32 %v1077, %v1091
        %v1096 = vmul.f32 %v1092, 1.442695
        %v1097 = vpow.pop %v1096
        %v1098 = vmul.f32 %v1093, 1.442695
        %v1099 = vpow.pop %v1098
        %v1100 = vmul.f32 %v1094, 1.442695
        %v1101 = vpow.pop %v1100
        %v1102 = vmul.f32 %v1095, 1.442695
        %v1103 = vpow.pop %v1102
        %v1104 = vsel %vm774, %v1097, 0.0
        %1105 = vadd.xlane.f32.xlu0 %v1104
        %v1106 = vpop.xlane.xlu0 %1105
        %v1107 = vsel %vm774, %v1099, 0.0
        %1108 = vadd.xlane.f32.xlu0 %v1107
        %v1109 = vpop.xlane.xlu0 %1108
        %v1110 = vsel %vm774, %v1101, 0.0
        %1111 = vadd.xlane.f32.xlu0 %v1110
        %v1112 = vpop.xlane.xlu0 %1111
        %v1113 = vsel %vm774, %v1103, 0.0
        %1114 = vadd.xlane.f32.xlu0 %v1113
        %v1115 = vpop.xlane.xlu0 %1114
        %v1116 = vrcp.pop %v1106
        %v1117 = vrcp.pop %v1109
        %v1118 = vrcp.pop %v1112
        %v1119 = vrcp.pop %v1115
        %v1120 = vmul.f32 %v1106, %v1116
        %v1121 = vmul.f32 %v1109, %v1117
        %v1122 = vmul.f32 %v1112, %v1118
        %v1123 = vmul.f32 %v1115, %v1119
        %v1124 = vsub.f32 2.0, %v1120
        %v1125 = vsub.f32 2.0, %v1121
        %v1126 = vsub.f32 2.0, %v1122
        %v1127 = vsub.f32 2.0, %v1123
        %v1128 = vmul.f32 %v1116, %v1124
        %v1129 = vmul.f32 %v1117, %v1125
        %v1130 = vmul.f32 %v1118, %v1126
        %v1131 = vmul.f32 %v1119, %v1127
        %v1132 = vmul.f32 %v1097, %v1128
        %v1133 = vmul.f32 %v1099, %v1129
        %v1134 = vmul.f32 %v1101, %v1130
        %v1135 = vmul.f32 %v1103, %v1131
        %1136 = vrot.lane.b32.xlu0 %v552, 112
        %v1137 = vpop.permute.xlu0 %1136
        %v1140 = vsel %vm774, %v1132, 0
        %1142 = vmatprep.subr.mxu0 0.0
        %1143 = vmatpush1.msra.mxu0 0.0
        %1144 = vmatprep.subr.mxu0 0.0
        %1145 = vmatpush1.msra.mxu0 0.0
        %1146 = vmatprep.subr.mxu0 0.0
        %1147 = vmatpush1.msra.mxu0 0.0
        %1148 = vmatprep.subr.mxu0 0.0
        %1149 = vmatpush1.msra.mxu0 0.0
        %1150 = vmatprep.subr.mxu0 0.0
        %1151 = vmatpush1.msra.mxu0 0.0
        %1152 = vmatprep.subr.mxu0 0.0
        %1153 = vmatpush1.msra.mxu0 0.0
        %1154 = vmatprep.subr.mxu0 0.0
        %1155 = vmatpush1.msra.mxu0 0.0
        %1156 = vmatprep.subr.mxu0 0.0
        %1157 = vmatpush1.msra.mxu0 0.0
        %1158 = vmatprep.subr.mxu0 0.0
        %1159 = vmatpush1.msra.mxu0 0.0
        %1160 = vmatprep.subr.mxu0 0.0
        %1161 = vmatpush1.msra.mxu0 0.0
        %1162 = vmatprep.subr.mxu0 0.0
        %1163 = vmatpush1.msra.mxu0 0.0
        %1164 = vmatprep.subr.mxu0 0.0
        %1165 = vmatpush1.msra.mxu0 0.0
        %1166 = vmatprep.subr.mxu0 0.0
        %1167 = vmatpush1.msra.mxu0 0.0
        %1168 = vmatprep.subr.mxu0 0.0
        %1169 = vmatpush1.msra.mxu0 0.0
        %1170 = vmatprep.subr.mxu0 0.0
        %1171 = vmatpush1.msra.mxu0 0.0
        %1172 = vmatprep.subr.mxu0 0.0
        %1173 = vmatpush1.msra.mxu0 %v1137
        %1174 = vmatprep.subr.mxu0 0.0
        %1175 = vmatpush2.msra.mxu0 0.0
        %1176 = vmatprep.subr.mxu0 0.0
        %1177 = vmatpush2.msra.mxu0 0.0
        %1178 = vmatprep.subr.mxu0 0.0
        %1179 = vmatpush2.msra.mxu0 0.0
        %1180 = vmatprep.subr.mxu0 0.0
        %1181 = vmatpush2.msra.mxu0 0.0
        %1182 = vmatprep.subr.mxu0 0.0
        %1183 = vmatpush2.msra.mxu0 0.0
        %1184 = vmatprep.subr.mxu0 0.0
        %1185 = vmatpush2.msra.mxu0 0.0
        %1186 = vmatprep.subr.mxu0 0.0
        %1187 = vmatpush2.msra.mxu0 0.0
        %1188 = vmatprep.subr.mxu0 0.0
        %1189 = vmatpush2.msra.mxu0 0.0
        %1190 = vmatprep.subr.mxu0 0.0
        %1191 = vmatpush2.msra.mxu0 0.0
        %1192 = vmatprep.subr.mxu0 0.0
        %1193 = vmatpush2.msra.mxu0 0.0
        %1194 = vmatprep.subr.mxu0 0.0
        %1195 = vmatpush2.msra.mxu0 0.0
        %1196 = vmatprep.subr.mxu0 0.0
        %1197 = vmatpush2.msra.mxu0 0.0
        %1198 = vmatprep.subr.mxu0 0.0
        %1199 = vmatpush2.msra.mxu0 0.0
        %1200 = vmatprep.subr.mxu0 0.0
        %1201 = vmatpush2.msra.mxu0 0.0
        %1202 = vmatprep.subr.mxu0 0.0
        %1203 = vmatpush2.msra.mxu0 0.0
        %1204 = vmatprep.subr.mxu0 0.0
        %1205 = vmatpush2.msra.mxu0 0.0
        %1206 = vmatprep.mubr.f32.mxu0 0.0
        %1207 = vmatmul.mubr.f32.gmra.mxu0 %v1140
        %v1208 = vpop.f32.mrf.mxu0
        %v1209 = vadd.f32 0.0, %v1208
        %v1210 = vpop.f32.mrf.mxu0
        %1211 = vdwg.mxu0
        %1212 = vrot.lane.b32.xlu0 %v622, 112
        %v1213 = vpop.permute.xlu0 %1212
        %v1216 = vsel %vm774, %v1133, 0
        %1218 = vmatprep.subr.mxu0 0.0
        %1219 = vmatpush1.msra.mxu0 0.0
        %1220 = vmatprep.subr.mxu0 0.0
        %1221 = vmatpush1.msra.mxu0 0.0
        %1222 = vmatprep.subr.mxu0 0.0
        %1223 = vmatpush1.msra.mxu0 0.0
        %1224 = vmatprep.subr.mxu0 0.0
        %1225 = vmatpush1.msra.mxu0 0.0
        %1226 = vmatprep.subr.mxu0 0.0
        %1227 = vmatpush1.msra.mxu0 0.0
        %1228 = vmatprep.subr.mxu0 0.0
        %1229 = vmatpush1.msra.mxu0 0.0
        %1230 = vmatprep.subr.mxu0 0.0
        %1231 = vmatpush1.msra.mxu0 0.0
        %1232 = vmatprep.subr.mxu0 0.0
        %1233 = vmatpush1.msra.mxu0 0.0
        %1234 = vmatprep.subr.mxu0 0.0
        %1235 = vmatpush1.msra.mxu0 0.0
        %1236 = vmatprep.subr.mxu0 0.0
        %1237 = vmatpush1.msra.mxu0 0.0
        %1238 = vmatprep.subr.mxu0 0.0
        %1239 = vmatpush1.msra.mxu0 0.0
        %1240 = vmatprep.subr.mxu0 0.0
        %1241 = vmatpush1.msra.mxu0 0.0
        %1242 = vmatprep.subr.mxu0 0.0
        %1243 = vmatpush1.msra.mxu0 0.0
        %1244 = vmatprep.subr.mxu0 0.0
        %1245 = vmatpush1.msra.mxu0 0.0
        %1246 = vmatprep.subr.mxu0 0.0
        %1247 = vmatpush1.msra.mxu0 0.0
        %1248 = vmatprep.subr.mxu0 0.0
        %1249 = vmatpush1.msra.mxu0 %v1213
        %1250 = vmatprep.subr.mxu0 0.0
        %1251 = vmatpush2.msra.mxu0 0.0
        %1252 = vmatprep.subr.mxu0 0.0
        %1253 = vmatpush2.msra.mxu0 0.0
        %1254 = vmatprep.subr.mxu0 0.0
        %1255 = vmatpush2.msra.mxu0 0.0
        %1256 = vmatprep.subr.mxu0 0.0
        %1257 = vmatpush2.msra.mxu0 0.0
        %1258 = vmatprep.subr.mxu0 0.0
        %1259 = vmatpush2.msra.mxu0 0.0
        %1260 = vmatprep.subr.mxu0 0.0
        %1261 = vmatpush2.msra.mxu0 0.0
        %1262 = vmatprep.subr.mxu0 0.0
        %1263 = vmatpush2.msra.mxu0 0.0
        %1264 = vmatprep.subr.mxu0 0.0
        %1265 = vmatpush2.msra.mxu0 0.0
        %1266 = vmatprep.subr.mxu0 0.0
        %1267 = vmatpush2.msra.mxu0 0.0
        %1268 = vmatprep.subr.mxu0 0.0
        %1269 = vmatpush2.msra.mxu0 0.0
        %1270 = vmatprep.subr.mxu0 0.0
        %1271 = vmatpush2.msra.mxu0 0.0
        %1272 = vmatprep.subr.mxu0 0.0
        %1273 = vmatpush2.msra.mxu0 0.0
        %1274 = vmatprep.subr.mxu0 0.0
        %1275 = vmatpush2.msra.mxu0 0.0
        %1276 = vmatprep.subr.mxu0 0.0
        %1277 = vmatpush2.msra.mxu0 0.0
        %1278 = vmatprep.subr.mxu0 0.0
        %1279 = vmatpush2.msra.mxu0 0.0
        %1280 = vmatprep.subr.mxu0 0.0
        %1281 = vmatpush2.msra.mxu0 0.0
        %1282 = vmatprep.mubr.f32.mxu0 0.0
        %1283 = vmatmul.mubr.f32.gmra.mxu0 %v1216
        %v1284 = vpop.f32.mrf.mxu0
        %v1285 = vadd.f32 0.0, %v1284
        %v1286 = vpop.f32.mrf.mxu0
        %1287 = vdwg.mxu0
        %1288 = vrot.lane.b32.xlu0 %v692, 112
        %v1289 = vpop.permute.xlu0 %1288
        %v1292 = vsel %vm774, %v1134, 0
        %1294 = vmatprep.subr.mxu0 0.0
        %1295 = vmatpush1.msra.mxu0 0.0
        %1296 = vmatprep.subr.mxu0 0.0
        %1297 = vmatpush1.msra.mxu0 0.0
        %1298 = vmatprep.subr.mxu0 0.0
        %1299 = vmatpush1.msra.mxu0 0.0
        %1300 = vmatprep.subr.mxu0 0.0
        %1301 = vmatpush1.msra.mxu0 0.0
        %1302 = vmatprep.subr.mxu0 0.0
        %1303 = vmatpush1.msra.mxu0 0.0
        %1304 = vmatprep.subr.mxu0 0.0
        %1305 = vmatpush1.msra.mxu0 0.0
        %1306 = vmatprep.subr.mxu0 0.0
        %1307 = vmatpush1.msra.mxu0 0.0
        %1308 = vmatprep.subr.mxu0 0.0
        %1309 = vmatpush1.msra.mxu0 0.0
        %1310 = vmatprep.subr.mxu0 0.0
        %1311 = vmatpush1.msra.mxu0 0.0
        %1312 = vmatprep.subr.mxu0 0.0
        %1313 = vmatpush1.msra.mxu0 0.0
        %1314 = vmatprep.subr.mxu0 0.0
        %1315 = vmatpush1.msra.mxu0 0.0
        %1316 = vmatprep.subr.mxu0 0.0
        %1317 = vmatpush1.msra.mxu0 0.0
        %1318 = vmatprep.subr.mxu0 0.0
        %1319 = vmatpush1.msra.mxu0 0.0
        %1320 = vmatprep.subr.mxu0 0.0
        %1321 = vmatpush1.msra.mxu0 0.0
        %1322 = vmatprep.subr.mxu0 0.0
        %1323 = vmatpush1.msra.mxu0 0.0
        %1324 = vmatprep.subr.mxu0 0.0
        %1325 = vmatpush1.msra.mxu0 %v1289
        %1326 = vmatprep.subr.mxu0 0.0
        %1327 = vmatpush2.msra.mxu0 0.0
        %1328 = vmatprep.subr.mxu0 0.0
        %1329 = vmatpush2.msra.mxu0 0.0
        %1330 = vmatprep.subr.mxu0 0.0
        %1331 = vmatpush2.msra.mxu0 0.0
        %1332 = vmatprep.subr.mxu0 0.0
        %1333 = vmatpush2.msra.mxu0 0.0
        %1334 = vmatprep.subr.mxu0 0.0
        %1335 = vmatpush2.msra.mxu0 0.0
        %1336 = vmatprep.subr.mxu0 0.0
        %1337 = vmatpush2.msra.mxu0 0.0
        %1338 = vmatprep.subr.mxu0 0.0
        %1339 = vmatpush2.msra.mxu0 0.0
        %1340 = vmatprep.subr.mxu0 0.0
        %1341 = vmatpush2.msra.mxu0 0.0
        %1342 = vmatprep.subr.mxu0 0.0
        %1343 = vmatpush2.msra.mxu0 0.0
        %1344 = vmatprep.subr.mxu0 0.0
        %1345 = vmatpush2.msra.mxu0 0.0
        %1346 = vmatprep.subr.mxu0 0.0
        %1347 = vmatpush2.msra.mxu0 0.0
        %1348 = vmatprep.subr.mxu0 0.0
        %1349 = vmatpush2.msra.mxu0 0.0
        %1350 = vmatprep.subr.mxu0 0.0
        %1351 = vmatpush2.msra.mxu0 0.0
        %1352 = vmatprep.subr.mxu0 0.0
        %1353 = vmatpush2.msra.mxu0 0.0
        %1354 = vmatprep.subr.mxu0 0.0
        %1355 = vmatpush2.msra.mxu0 0.0
        %1356 = vmatprep.subr.mxu0 0.0
        %1357 = vmatpush2.msra.mxu0 0.0
        %1358 = vmatprep.mubr.f32.mxu0 0.0
        %1359 = vmatmul.mubr.f32.gmra.mxu0 %v1292
        %v1360 = vpop.f32.mrf.mxu0
        %v1361 = vadd.f32 0.0, %v1360
        %v1362 = vpop.f32.mrf.mxu0
        %1363 = vdwg.mxu0
        %1364 = vrot.lane.b32.xlu0 %v762, 112
        %v1365 = vpop.permute.xlu0 %1364
        %v1368 = vsel %vm774, %v1135, 0
        %1370 = vmatprep.subr.mxu0 0.0
        %1371 = vmatpush1.msra.mxu0 0.0
        %1372 = vmatprep.subr.mxu0 0.0
        %1373 = vmatpush1.msra.mxu0 0.0
        %1374 = vmatprep.subr.mxu0 0.0
        %1375 = vmatpush1.msra.mxu0 0.0
        %1376 = vmatprep.subr.mxu0 0.0
        %1377 = vmatpush1.msra.mxu0 0.0
        %1378 = vmatprep.subr.mxu0 0.0
        %1379 = vmatpush1.msra.mxu0 0.0
        %1380 = vmatprep.subr.mxu0 0.0
        %1381 = vmatpush1.msra.mxu0 0.0
        %1382 = vmatprep.subr.mxu0 0.0
        %1383 = vmatpush1.msra.mxu0 0.0
        %1384 = vmatprep.subr.mxu0 0.0
        %1385 = vmatpush1.msra.mxu0 0.0
        %1386 = vmatprep.subr.mxu0 0.0
        %1387 = vmatpush1.msra.mxu0 0.0
        %1388 = vmatprep.subr.mxu0 0.0
        %1389 = vmatpush1.msra.mxu0 0.0
        %1390 = vmatprep.subr.mxu0 0.0
        %1391 = vmatpush1.msra.mxu0 0.0
        %1392 = vmatprep.subr.mxu0 0.0
        %1393 = vmatpush1.msra.mxu0 0.0
        %1394 = vmatprep.subr.mxu0 0.0
        %1395 = vmatpush1.msra.mxu0 0.0
        %1396 = vmatprep.subr.mxu0 0.0
        %1397 = vmatpush1.msra.mxu0 0.0
        %1398 = vmatprep.subr.mxu0 0.0
        %1399 = vmatpush1.msra.mxu0 0.0
        %1400 = vmatprep.subr.mxu0 0.0
        %1401 = vmatpush1.msra.mxu0 %v1365
        %1402 = vmatprep.subr.mxu0 0.0
        %1403 = vmatpush2.msra.mxu0 0.0
        %1404 = vmatprep.subr.mxu0 0.0
        %1405 = vmatpush2.msra.mxu0 0.0
        %1406 = vmatprep.subr.mxu0 0.0
        %1407 = vmatpush2.msra.mxu0 0.0
        %1408 = vmatprep.subr.mxu0 0.0
        %1409 = vmatpush2.msra.mxu0 0.0
        %1410 = vmatprep.subr.mxu0 0.0
        %1411 = vmatpush2.msra.mxu0 0.0
        %1412 = vmatprep.subr.mxu0 0.0
        %1413 = vmatpush2.msra.mxu0 0.0
        %1414 = vmatprep.subr.mxu0 0.0
        %1415 = vmatpush2.msra.mxu0 0.0
        %1416 = vmatprep.subr.mxu0 0.0
        %1417 = vmatpush2.msra.mxu0 0.0
        %1418 = vmatprep.subr.mxu0 0.0
        %1419 = vmatpush2.msra.mxu0 0.0
        %1420 = vmatprep.subr.mxu0 0.0
        %1421 = vmatpush2.msra.mxu0 0.0
        %1422 = vmatprep.subr.mxu0 0.0
        %1423 = vmatpush2.msra.mxu0 0.0
        %1424 = vmatprep.subr.mxu0 0.0
        %1425 = vmatpush2.msra.mxu0 0.0
        %1426 = vmatprep.subr.mxu0 0.0
        %1427 = vmatpush2.msra.mxu0 0.0
        %1428 = vmatprep.subr.mxu0 0.0
        %1429 = vmatpush2.msra.mxu0 0.0
        %1430 = vmatprep.subr.mxu0 0.0
        %1431 = vmatpush2.msra.mxu0 0.0
        %1432 = vmatprep.subr.mxu0 0.0
        %1433 = vmatpush2.msra.mxu0 0.0
        %1434 = vmatprep.mubr.f32.mxu0 0.0
        %1435 = vmatmul.mubr.f32.gmra.mxu0 %v1368
        %v1436 = vpop.f32.mrf.mxu0
        %v1437 = vadd.f32 0.0, %v1436
        %v1438 = vpop.f32.mrf.mxu0
        %1439 = vdwg.mxu0
        %v1440 = vld [vmem:[%s3] sm:$0xff]
        %v1441 = vld [vmem:[%s3 + $0x8] sm:$0xff]
        %v1442 = vld [vmem:[%s3 + $0x10] sm:$0xff]
        %v1443 = vld [vmem:[%s3 + $0x18] sm:$0xff]
        %v1445 = vsel %vm774, %v1209, 0
        %1447 = vmatprep.subr.mxu0 0.0
        %1448 = vmatpush1.msra.mxu0 0.0
        %1449 = vmatprep.subr.mxu0 0.0
        %1450 = vmatpush1.msra.mxu0 0.0
        %1451 = vmatprep.subr.mxu0 0.0
        %1452 = vmatpush1.msra.mxu0 0.0
        %1453 = vmatprep.subr.mxu0 0.0
        %1454 = vmatpush1.msra.mxu0 0.0
        %1455 = vmatprep.subr.mxu0 0.0
        %1456 = vmatpush1.msra.mxu0 0.0
        %1457 = vmatprep.subr.mxu0 0.0
        %1458 = vmatpush1.msra.mxu0 0.0
        %1459 = vmatprep.subr.mxu0 0.0
        %1460 = vmatpush1.msra.mxu0 0.0
        %1461 = vmatprep.subr.mxu0 0.0
        %1462 = vmatpush1.msra.mxu0 0.0
        %1463 = vmatprep.subr.mxu0 0.0
        %1464 = vmatpush1.msra.mxu0 0.0
        %1465 = vmatprep.subr.mxu0 0.0
        %1466 = vmatpush1.msra.mxu0 0.0
        %1467 = vmatprep.subr.mxu0 0.0
        %1468 = vmatpush1.msra.mxu0 0.0
        %1469 = vmatprep.subr.mxu0 0.0
        %1470 = vmatpush1.msra.mxu0 0.0
        %1471 = vmatprep.subr.mxu0 0.0
        %1472 = vmatpush1.msra.mxu0 0.0
        %1473 = vmatprep.subr.mxu0 0.0
        %1474 = vmatpush1.msra.mxu0 0.0
        %1475 = vmatprep.subr.mxu0 0.0
        %1476 = vmatpush1.msra.mxu0 0.0
        %1477 = vmatprep.subr.mxu0 0.0
        %1478 = vmatpush1.msra.mxu0 %v1440
        %1479 = vmatprep.subr.mxu0 0.0
        %1480 = vmatpush2.msra.mxu0 0.0
        %1481 = vmatprep.subr.mxu0 0.0
        %1482 = vmatpush2.msra.mxu0 0.0
        %1483 = vmatprep.subr.mxu0 0.0
        %1484 = vmatpush2.msra.mxu0 0.0
        %1485 = vmatprep.subr.mxu0 0.0
        %1486 = vmatpush2.msra.mxu0 0.0
        %1487 = vmatprep.subr.mxu0 0.0
        %1488 = vmatpush2.msra.mxu0 0.0
        %1489 = vmatprep.subr.mxu0 0.0
        %1490 = vmatpush2.msra.mxu0 0.0
        %1491 = vmatprep.subr.mxu0 0.0
        %1492 = vmatpush2.msra.mxu0 0.0
        %1493 = vmatprep.subr.mxu0 0.0
        %1494 = vmatpush2.msra.mxu0 0.0
        %1495 = vmatprep.subr.mxu0 0.0
        %1496 = vmatpush2.msra.mxu0 0.0
        %1497 = vmatprep.subr.mxu0 0.0
        %1498 = vmatpush2.msra.mxu0 0.0
        %1499 = vmatprep.subr.mxu0 0.0
        %1500 = vmatpush2.msra.mxu0 0.0
        %1501 = vmatprep.subr.mxu0 0.0
        %1502 = vmatpush2.msra.mxu0 0.0
        %1503 = vmatprep.subr.mxu0 0.0
        %1504 = vmatpush2.msra.mxu0 0.0
        %1505 = vmatprep.subr.mxu0 0.0
        %1506 = vmatpush2.msra.mxu0 0.0
        %1507 = vmatprep.subr.mxu0 0.0
        %1508 = vmatpush2.msra.mxu0 0.0
        %1509 = vmatprep.subr.mxu0 0.0
        %1510 = vmatpush2.msra.mxu0 0.0
        %1511 = vmatprep.mubr.f32.mxu0 0.0
        %1512 = vmatmul.mubr.f32.gmra.mxu0 %v1445
        %v1513 = vpop.f32.mrf.mxu0
        %v1514 = vadd.f32 0.0, %v1513
        %v1515 = vpop.f32.mrf.mxu0
        %1516 = vdwg.mxu0
        %v1518 = vsel %vm774, %v1285, 0
        %1520 = vmatprep.subr.mxu0 0.0
        %1521 = vmatpush1.msra.mxu0 0.0
        %1522 = vmatprep.subr.mxu0 0.0
        %1523 = vmatpush1.msra.mxu0 0.0
        %1524 = vmatprep.subr.mxu0 0.0
        %1525 = vmatpush1.msra.mxu0 0.0
        %1526 = vmatprep.subr.mxu0 0.0
        %1527 = vmatpush1.msra.mxu0 0.0
        %1528 = vmatprep.subr.mxu0 0.0
        %1529 = vmatpush1.msra.mxu0 0.0
        %1530 = vmatprep.subr.mxu0 0.0
        %1531 = vmatpush1.msra.mxu0 0.0
        %1532 = vmatprep.subr.mxu0 0.0
        %1533 = vmatpush1.msra.mxu0 0.0
        %1534 = vmatprep.subr.mxu0 0.0
        %1535 = vmatpush1.msra.mxu0 0.0
        %1536 = vmatprep.subr.mxu0 0.0
        %1537 = vmatpush1.msra.mxu0 0.0
        %1538 = vmatprep.subr.mxu0 0.0
        %1539 = vmatpush1.msra.mxu0 0.0
        %1540 = vmatprep.subr.mxu0 0.0
        %1541 = vmatpush1.msra.mxu0 0.0
        %1542 = vmatprep.subr.mxu0 0.0
        %1543 = vmatpush1.msra.mxu0 0.0
        %1544 = vmatprep.subr.mxu0 0.0
        %1545 = vmatpush1.msra.mxu0 0.0
        %1546 = vmatprep.subr.mxu0 0.0
        %1547 = vmatpush1.msra.mxu0 0.0
        %1548 = vmatprep.subr.mxu0 0.0
        %1549 = vmatpush1.msra.mxu0 0.0
        %1550 = vmatprep.subr.mxu0 0.0
        %1551 = vmatpush1.msra.mxu0 %v1441
        %1552 = vmatprep.subr.mxu0 0.0
        %1553 = vmatpush2.msra.mxu0 0.0
        %1554 = vmatprep.subr.mxu0 0.0
        %1555 = vmatpush2.msra.mxu0 0.0
        %1556 = vmatprep.subr.mxu0 0.0
        %1557 = vmatpush2.msra.mxu0 0.0
        %1558 = vmatprep.subr.mxu0 0.0
        %1559 = vmatpush2.msra.mxu0 0.0
        %1560 = vmatprep.subr.mxu0 0.0
        %1561 = vmatpush2.msra.mxu0 0.0
        %1562 = vmatprep.subr.mxu0 0.0
        %1563 = vmatpush2.msra.mxu0 0.0
        %1564 = vmatprep.subr.mxu0 0.0
        %1565 = vmatpush2.msra.mxu0 0.0
        %1566 = vmatprep.subr.mxu0 0.0
        %1567 = vmatpush2.msra.mxu0 0.0
        %1568 = vmatprep.subr.mxu0 0.0
        %1569 = vmatpush2.msra.mxu0 0.0
        %1570 = vmatprep.subr.mxu0 0.0
        %1571 = vmatpush2.msra.mxu0 0.0
        %1572 = vmatprep.subr.mxu0 0.0
        %1573 = vmatpush2.msra.mxu0 0.0
        %1574 = vmatprep.subr.mxu0 0.0
        %1575 = vmatpush2.msra.mxu0 0.0
        %1576 = vmatprep.subr.mxu0 0.0
        %1577 = vmatpush2.msra.mxu0 0.0
        %1578 = vmatprep.subr.mxu0 0.0
        %1579 = vmatpush2.msra.mxu0 0.0
        %1580 = vmatprep.subr.mxu0 0.0
        %1581 = vmatpush2.msra.mxu0 0.0
        %1582 = vmatprep.subr.mxu0 0.0
        %1583 = vmatpush2.msra.mxu0 0.0
        %1584 = vmatprep.mubr.f32.mxu0 0.0
        %1585 = vmatmul.mubr.f32.gmra.mxu0 %v1518
        %v1586 = vpop.f32.mrf.mxu0
        %v1587 = vadd.f32 0.0, %v1586
        %v1588 = vpop.f32.mrf.mxu0
        %1589 = vdwg.mxu0
        %v1591 = vsel %vm774, %v1361, 0
        %1593 = vmatprep.subr.mxu0 0.0
        %1594 = vmatpush1.msra.mxu0 0.0
        %1595 = vmatprep.subr.mxu0 0.0
        %1596 = vmatpush1.msra.mxu0 0.0
        %1597 = vmatprep.subr.mxu0 0.0
        %1598 = vmatpush1.msra.mxu0 0.0
        %1599 = vmatprep.subr.mxu0 0.0
        %1600 = vmatpush1.msra.mxu0 0.0
        %1601 = vmatprep.subr.mxu0 0.0
        %1602 = vmatpush1.msra.mxu0 0.0
        %1603 = vmatprep.subr.mxu0 0.0
        %1604 = vmatpush1.msra.mxu0 0.0
        %1605 = vmatprep.subr.mxu0 0.0
        %1606 = vmatpush1.msra.mxu0 0.0
        %1607 = vmatprep.subr.mxu0 0.0
        %1608 = vmatpush1.msra.mxu0 0.0
        %1609 = vmatprep.subr.mxu0 0.0
        %1610 = vmatpush1.msra.mxu0 0.0
        %1611 = vmatprep.subr.mxu0 0.0
        %1612 = vmatpush1.msra.mxu0 0.0
        %1613 = vmatprep.subr.mxu0 0.0
        %1614 = vmatpush1.msra.mxu0 0.0
        %1615 = vmatprep.subr.mxu0 0.0
        %1616 = vmatpush1.msra.mxu0 0.0
        %1617 = vmatprep.subr.mxu0 0.0
        %1618 = vmatpush1.msra.mxu0 0.0
        %1619 = vmatprep.subr.mxu0 0.0
        %1620 = vmatpush1.msra.mxu0 0.0
        %1621 = vmatprep.subr.mxu0 0.0
        %1622 = vmatpush1.msra.mxu0 0.0
        %1623 = vmatprep.subr.mxu0 0.0
        %1624 = vmatpush1.msra.mxu0 %v1442
        %1625 = vmatprep.subr.mxu0 0.0
        %1626 = vmatpush2.msra.mxu0 0.0
        %1627 = vmatprep.subr.mxu0 0.0
        %1628 = vmatpush2.msra.mxu0 0.0
        %1629 = vmatprep.subr.mxu0 0.0
        %1630 = vmatpush2.msra.mxu0 0.0
        %1631 = vmatprep.subr.mxu0 0.0
        %1632 = vmatpush2.msra.mxu0 0.0
        %1633 = vmatprep.subr.mxu0 0.0
        %1634 = vmatpush2.msra.mxu0 0.0
        %1635 = vmatprep.subr.mxu0 0.0
        %1636 = vmatpush2.msra.mxu0 0.0
        %1637 = vmatprep.subr.mxu0 0.0
        %1638 = vmatpush2.msra.mxu0 0.0
        %1639 = vmatprep.subr.mxu0 0.0
        %1640 = vmatpush2.msra.mxu0 0.0
        %1641 = vmatprep.subr.mxu0 0.0
        %1642 = vmatpush2.msra.mxu0 0.0
        %1643 = vmatprep.subr.mxu0 0.0
        %1644 = vmatpush2.msra.mxu0 0.0
        %1645 = vmatprep.subr.mxu0 0.0
        %1646 = vmatpush2.msra.mxu0 0.0
        %1647 = vmatprep.subr.mxu0 0.0
        %1648 = vmatpush2.msra.mxu0 0.0
        %1649 = vmatprep.subr.mxu0 0.0
        %1650 = vmatpush2.msra.mxu0 0.0
        %1651 = vmatprep.subr.mxu0 0.0
        %1652 = vmatpush2.msra.mxu0 0.0
        %1653 = vmatprep.subr.mxu0 0.0
        %1654 = vmatpush2.msra.mxu0 0.0
        %1655 = vmatprep.subr.mxu0 0.0
        %1656 = vmatpush2.msra.mxu0 0.0
        %1657 = vmatprep.mubr.f32.mxu0 0.0
        %1658 = vmatmul.mubr.f32.gmra.mxu0 %v1591
        %v1659 = vpop.f32.mrf.mxu0
        %v1660 = vadd.f32 0.0, %v1659
        %v1661 = vpop.f32.mrf.mxu0
        %1662 = vdwg.mxu0
        %v1664 = vsel %vm774, %v1437, 0
        %1666 = vmatprep.subr.mxu0 0.0
        %1667 = vmatpush1.msra.mxu0 0.0
        %1668 = vmatprep.subr.mxu0 0.0
        %1669 = vmatpush1.msra.mxu0 0.0
        %1670 = vmatprep.subr.mxu0 0.0
        %1671 = vmatpush1.msra.mxu0 0.0
        %1672 = vmatprep.subr.mxu0 0.0
        %1673 = vmatpush1.msra.mxu0 0.0
        %1674 = vmatprep.subr.mxu0 0.0
        %1675 = vmatpush1.msra.mxu0 0.0
        %1676 = vmatprep.subr.mxu0 0.0
        %1677 = vmatpush1.msra.mxu0 0.0
        %1678 = vmatprep.subr.mxu0 0.0
        %1679 = vmatpush1.msra.mxu0 0.0
        %1680 = vmatprep.subr.mxu0 0.0
        %1681 = vmatpush1.msra.mxu0 0.0
        %1682 = vmatprep.subr.mxu0 0.0
        %1683 = vmatpush1.msra.mxu0 0.0
        %1684 = vmatprep.subr.mxu0 0.0
        %1685 = vmatpush1.msra.mxu0 0.0
        %1686 = vmatprep.subr.mxu0 0.0
        %1687 = vmatpush1.msra.mxu0 0.0
        %1688 = vmatprep.subr.mxu0 0.0
        %1689 = vmatpush1.msra.mxu0 0.0
        %1690 = vmatprep.subr.mxu0 0.0
        %1691 = vmatpush1.msra.mxu0 0.0
        %1692 = vmatprep.subr.mxu0 0.0
        %1693 = vmatpush1.msra.mxu0 0.0
        %1694 = vmatprep.subr.mxu0 0.0
        %1695 = vmatpush1.msra.mxu0 0.0
        %1696 = vmatprep.subr.mxu0 0.0
        %1697 = vmatpush1.msra.mxu0 %v1443
        %1698 = vmatprep.subr.mxu0 0.0
        %1699 = vmatpush2.msra.mxu0 0.0
        %1700 = vmatprep.subr.mxu0 0.0
        %1701 = vmatpush2.msra.mxu0 0.0
        %1702 = vmatprep.subr.mxu0 0.0
        %1703 = vmatpush2.msra.mxu0 0.0
        %1704 = vmatprep.subr.mxu0 0.0
        %1705 = vmatpush2.msra.mxu0 0.0
        %1706 = vmatprep.subr.mxu0 0.0
        %1707 = vmatpush2.msra.mxu0 0.0
        %1708 = vmatprep.subr.mxu0 0.0
        %1709 = vmatpush2.msra.mxu0 0.0
        %1710 = vmatprep.subr.mxu0 0.0
        %1711 = vmatpush2.msra.mxu0 0.0
        %1712 = vmatprep.subr.mxu0 0.0
        %1713 = vmatpush2.msra.mxu0 0.0
        %1714 = vmatprep.subr.mxu0 0.0
        %1715 = vmatpush2.msra.mxu0 0.0
        %1716 = vmatprep.subr.mxu0 0.0
        %1717 = vmatpush2.msra.mxu0 0.0
        %1718 = vmatprep.subr.mxu0 0.0
        %1719 = vmatpush2.msra.mxu0 0.0
        %1720 = vmatprep.subr.mxu0 0.0
        %1721 = vmatpush2.msra.mxu0 0.0
        %1722 = vmatprep.subr.mxu0 0.0
        %1723 = vmatpush2.msra.mxu0 0.0
        %1724 = vmatprep.subr.mxu0 0.0
        %1725 = vmatpush2.msra.mxu0 0.0
        %1726 = vmatprep.subr.mxu0 0.0
        %1727 = vmatpush2.msra.mxu0 0.0
        %1728 = vmatprep.subr.mxu0 0.0
        %1729 = vmatpush2.msra.mxu0 0.0
        %1730 = vmatprep.mubr.f32.mxu0 0.0
        %1731 = vmatmul.mubr.f32.gmra.mxu0 %v1664
        %v1732 = vpop.f32.mrf.mxu0
        %v1733 = vadd.f32 0.0, %v1732
        %v1734 = vpop.f32.mrf.mxu0
        %1735 = vdwg.mxu0
        %v1736 = vsel %vm481, %v1514, 0.0
        %v1737 = vsel %vm481, %v1587, 0.0
        %v1738 = vadd.f32 %v1736, %v1737
        %v1739 = vsel %vm481, %v1660, 0.0
        %v1740 = vadd.f32 %v1738, %v1739
        %v1741 = vsel %vm481, %v1733, 0.0
        %v1742 = vadd.f32 %v1740, %v1741
        %v1743 = vld [vmem:[%s4] sm:$0x1]
        %v1745 = vlaneseq
        %v1746 = vshrl.u32 %v1745, 7
        %v1747 = vsub.s32 0, %v1746
        %v1748 = vrot.slane %v1743, %v1747
        %v1750 = vadd.f32 %v1742, %v1748
        %v1751 = vadd.f32 %v436, %v1750
        %v1752 = vld [vmem:[%s5] sm:$0x1]
        %v1753 = vld [vmem:[%s6] sm:$0x1]
        %v1754 = vsel %vm481, %v1751, 0.0
        %1755 = vadd.xlane.f32.xlu0 %v1754
        %v1756 = vpop.xlane.xlu0 %1755
        %v1757 = vrcp.pop 32.0
        %v1758 = vmul.f32 %v1756, %v1757
        %v1759 = vsub.f32 %v1751, %v1758
        %v1760 = vmul.f32 %v1759, %v1759
        %v1761 = vsel %vm481, %v1760, 0.0
        %1762 = vadd.xlane.f32.xlu0 %v1761
        %v1763 = vpop.xlane.xlu0 %1762
        %v1764 = vmul.f32 %v1763, %v1757
        %v1765 = vadd.f32 %v1764, 1e-05
        %v1766 = vrsqrt.pop %v1765
        %v1767 = vmul.f32 %v1759, %v1766
        %v1769 = vlaneseq
        %v1770 = vshrl.u32 %v1769, 7
        %v1771 = vsub.s32 0, %v1770
        %v1772 = vrot.slane %v1752, %v1771
        %v1774 = vmul.f32 %v1767, %v1772
        %v1776 = vlaneseq
        %v1777 = vshrl.u32 %v1776, 7
        %v1778 = vsub.s32 0, %v1777
        %v1779 = vrot.slane %v1753, %v1778
        %v1781 = vadd.f32 %v1774, %v1779
        %v1782 = vld [vmem:[%s7] sm:$0xff]
        %v1783 = vld [vmem:[%s7 + $0x8] sm:$0xff]
        %v1784 = vld [vmem:[%s7 + $0x10] sm:$0xff]
        %v1785 = vld [vmem:[%s7 + $0x18] sm:$0xff]
        %v1786 = vld [vmem:[%s8] sm:$0x1]
        %v1788 = vlaneseq
        %v1789 = vshrl.u32 %v1788, 7
        %v1790 = vsub.s32 0, %v1789
        %v1791 = vrot.slane %v1786, %v1790
        %v1794 = vsel %vm481, %v1781, 0
        %1796 = vmatprep.subr.mxu0 0.0
        %1797 = vmatpush1.msra.mxu0 0.0
        %1798 = vmatprep.subr.mxu0 0.0
        %1799 = vmatpush1.msra.mxu0 0.0
        %1800 = vmatprep.subr.mxu0 0.0
        %1801 = vmatpush1.msra.mxu0 0.0
        %1802 = vmatprep.subr.mxu0 0.0
        %1803 = vmatpush1.msra.mxu0 0.0
        %1804 = vmatprep.subr.mxu0 0.0
        %1805 = vmatpush1.msra.mxu0 0.0
        %1806 = vmatprep.subr.mxu0 0.0
        %1807 = vmatpush1.msra.mxu0 0.0
        %1808 = vmatprep.subr.mxu0 0.0
        %1809 = vmatpush1.msra.mxu0 0.0
        %1810 = vmatprep.subr.mxu0 0.0
        %1811 = vmatpush1.msra.mxu0 0.0
        %1812 = vmatprep.subr.mxu0 0.0
        %1813 = vmatpush1.msra.mxu0 0.0
        %1814 = vmatprep.subr.mxu0 0.0
        %1815 = vmatpush1.msra.mxu0 0.0
        %1816 = vmatprep.subr.mxu0 0.0
        %1817 = vmatpush1.msra.mxu0 0.0
        %1818 = vmatprep.subr.mxu0 0.0
        %1819 = vmatpush1.msra.mxu0 0.0
        %1820 = vmatprep.subr.mxu0 0.0
        %1821 = vmatpush1.msra.mxu0 %v1785
        %1822 = vmatprep.subr.mxu0 0.0
        %1823 = vmatpush1.msra.mxu0 %v1784
        %1824 = vmatprep.subr.mxu0 0.0
        %1825 = vmatpush1.msra.mxu0 %v1783
        %1826 = vmatprep.subr.mxu0 0.0
        %1827 = vmatpush1.msra.mxu0 %v1782
        %1828 = vmatprep.subr.mxu0 0.0
        %1829 = vmatpush2.msra.mxu0 0.0
        %1830 = vmatprep.subr.mxu0 0.0
        %1831 = vmatpush2.msra.mxu0 0.0
        %1832 = vmatprep.subr.mxu0 0.0
        %1833 = vmatpush2.msra.mxu0 0.0
        %1834 = vmatprep.subr.mxu0 0.0
        %1835 = vmatpush2.msra.mxu0 0.0
        %1836 = vmatprep.subr.mxu0 0.0
        %1837 = vmatpush2.msra.mxu0 0.0
        %1838 = vmatprep.subr.mxu0 0.0
        %1839 = vmatpush2.msra.mxu0 0.0
        %1840 = vmatprep.subr.mxu0 0.0
        %1841 = vmatpush2.msra.mxu0 0.0
        %1842 = vmatprep.subr.mxu0 0.0
        %1843 = vmatpush2.msra.mxu0 0.0
        %1844 = vmatprep.subr.mxu0 0.0
        %1845 = vmatpush2.msra.mxu0 0.0
        %1846 = vmatprep.subr.mxu0 0.0
        %1847 = vmatpush2.msra.mxu0 0.0
        %1848 = vmatprep.subr.mxu0 0.0
        %1849 = vmatpush2.msra.mxu0 0.0
        %1850 = vmatprep.subr.mxu0 0.0
        %1851 = vmatpush2.msra.mxu0 0.0
        %1852 = vmatprep.subr.mxu0 0.0
        %1853 = vmatpush2.msra.mxu0 0.0
        %1854 = vmatprep.subr.mxu0 0.0
        %1855 = vmatpush2.msra.mxu0 0.0
        %1856 = vmatprep.subr.mxu0 0.0
        %1857 = vmatpush2.msra.mxu0 0.0
        %1858 = vmatprep.subr.mxu0 0.0
        %1859 = vmatpush2.msra.mxu0 0.0
        %1860 = vmatprep.mubr.f32.mxu0 0.0
        %1861 = vmatmul.mubr.f32.gmra.mxu0 %v1794
        %v1862 = vpop.f32.mrf.mxu0
        %v1863 = vadd.f32 %v1791, %v1862
        %v1864 = vpop.f32.mrf.mxu0
        %1865 = vdwg.mxu0
        %v1866 = vmul.f32 %v1863, 0.5
        %v1867 = vmul.f32 %v1863, 0.044715
        %v1868 = vmul.f32 %v1867, %v1863
        %v1869 = vmul.f32 %v1868, %v1863
        %v1870 = vadd.f32 %v1863, %v1869
        %v1871 = vmul.f32 %v1870, 0.7978846
        %v1872 = vtanh.pop %v1871
        %v1873 = vadd.f32 %v1872, 1.0
        %v1874 = vmul.f32 %v1866, %v1873
        %v1875 = vld [vmem:[%s9] sm:$0xff]
        %v1876 = vld [vmem:[%s9 + $0x8] sm:$0xff]
        %v1877 = vld [vmem:[%s9 + $0x10] sm:$0xff]
        %v1878 = vld [vmem:[%s9 + $0x18] sm:$0xff]
        %v1879 = vld [vmem:[%s9 + $0x20] sm:$0xff]
        %v1880 = vld [vmem:[%s9 + $0x28] sm:$0xff]
        %v1881 = vld [vmem:[%s9 + $0x30] sm:$0xff]
        %v1882 = vld [vmem:[%s9 + $0x38] sm:$0xff]
        %v1883 = vld [vmem:[%s9 + $0x40] sm:$0xff]
        %v1884 = vld [vmem:[%s9 + $0x48] sm:$0xff]
        %v1885 = vld [vmem:[%s9 + $0x50] sm:$0xff]
        %v1886 = vld [vmem:[%s9 + $0x58] sm:$0xff]
        %v1887 = vld [vmem:[%s9 + $0x60] sm:$0xff]
        %v1888 = vld [vmem:[%s9 + $0x68] sm:$0xff]
        %v1889 = vld [vmem:[%s9 + $0x70] sm:$0xff]
        %v1890 = vld [vmem:[%s9 + $0x78] sm:$0xff]
        %v1891 = vld [vmem:[%s10] sm:$0x1]
        %v1893 = vlaneseq
        %v1894 = vshrl.u32 %v1893, 7
        %v1895 = vsub.s32 0, %v1894
        %v1896 = vrot.slane %v1891, %v1895
        %1898 = vmatprep.subr.mxu0 0.0
        %1899 = vmatpush1.msra.mxu0 %v1890
        %1900 = vmatprep.subr.mxu0 0.0
        %1901 = vmatpush1.msra.mxu0 %v1889
        %1902 = vmatprep.subr.mxu0 0.0
        %1903 = vmatpush1.msra.mxu0 %v1888
        %1904 = vmatprep.subr.mxu0 0.0
        %1905 = vmatpush1.msra.mxu0 %v1887
        %1906 = vmatprep.subr.mxu0 0.0
        %1907 = vmatpush1.msra.mxu0 %v1886
        %1908 = vmatprep.subr.mxu0 0.0
        %1909 = vmatpush1.msra.mxu0 %v1885
        %1910 = vmatprep.subr.mxu0 0.0
        %1911 = vmatpush1.msra.mxu0 %v1884
        %1912 = vmatprep.subr.mxu0 0.0
        %1913 = vmatpush1.msra.mxu0 %v1883
        %1914 = vmatprep.subr.mxu0 0.0
        %1915 = vmatpush1.msra.mxu0 %v1882
        %1916 = vmatprep.subr.mxu0 0.0
        %1917 = vmatpush1.msra.mxu0 %v1881
        %1918 = vmatprep.subr.mxu0 0.0
        %1919 = vmatpush1.msra.mxu0 %v1880
        %1920 = vmatprep.subr.mxu0 0.0
        %1921 = vmatpush1.msra.mxu0 %v1879
        %1922 = vmatprep.subr.mxu0 0.0
        %1923 = vmatpush1.msra.mxu0 %v1878
        %1924 = vmatprep.subr.mxu0 0.0
        %1925 = vmatpush1.msra.mxu0 %v1877
        %1926 = vmatprep.subr.mxu0 0.0
        %1927 = vmatpush1.msra.mxu0 %v1876
        %1928 = vmatprep.subr.mxu0 0.0
        %1929 = vmatpush1.msra.mxu0 %v1875
        %1930 = vmatprep.subr.mxu0 0.0
        %1931 = vmatpush2.msra.mxu0 0.0
        %1932 = vmatprep.subr.mxu0 0.0
        %1933 = vmatpush2.msra.mxu0 0.0
        %1934 = vmatprep.subr.mxu0 0.0
        %1935 = vmatpush2.msra.mxu0 0.0
        %1936 = vmatprep.subr.mxu0 0.0
        %1937 = vmatpush2.msra.mxu0 0.0
        %1938 = vmatprep.subr.mxu0 0.0
        %1939 = vmatpush2.msra.mxu0 0.0
        %1940 = vmatprep.subr.mxu0 0.0
        %1941 = vmatpush2.msra.mxu0 0.0
        %1942 = vmatprep.subr.mxu0 0.0
        %1943 = vmatpush2.msra.mxu0 0.0
        %1944 = vmatprep.subr.mxu0 0.0
        %1945 = vmatpush2.msra.mxu0 0.0
        %1946 = vmatprep.subr.mxu0 0.0
        %1947 = vmatpush2.msra.mxu0 0.0
        %1948 = vmatprep.subr.mxu0 0.0
        %1949 = vmatpush2.msra.mxu0 0.0
        %1950 = vmatprep.subr.mxu0 0.0
        %1951 = vmatpush2.msra.mxu0 0.0
        %1952 = vmatprep.subr.mxu0 0.0
        %1953 = vmatpush2.msra.mxu0 0.0
        %1954 = vmatprep.subr.mxu0 0.0
        %1955 = vmatpush2.msra.mxu0 0.0
        %1956 = vmatprep.subr.mxu0 0.0
        %1957 = vmatpush2.msra.mxu0 0.0
        %1958 = vmatprep.subr.mxu0 0.0
        %1959 = vmatpush2.msra.mxu0 0.0
        %1960 = vmatprep.subr.mxu0 0.0
        %1961 = vmatpush2.msra.mxu0 0.0
        %1962 = vmatprep.mubr.f32.mxu0 0.0
        %1963 = vmatmul.mubr.f32.gmra.mxu0 %v1874
        %v1964 = vpop.f32.mrf.mxu0
        %v1965 = vadd.f32 %v1896, %v1964
        %v1966 = vpop.f32.mrf.mxu0
        %1967 = vdwg.mxu0
        %v1968 = vadd.f32 %v1781, %v1965
        %v1969 = vld [vmem:[%s11] sm:$0x1]
        %v1970 = vld [vmem:[%s12] sm:$0x1]
        %v1971 = vsel %vm481, %v1968, 0.0
        %1972 = vadd.xlane.f32.xlu0 %v1971
        %v1973 = vpop.xlane.xlu0 %1972
        %v1974 = vmul.f32 %v1973, %v1757
        %v1975 = vsub.f32 %v1968, %v1974
        %v1976 = vmul.f32 %v1975, %v1975
        %v1977 = vsel %vm481, %v1976, 0.0
        %1978 = vadd.xlane.f32.xlu0 %v1977
        %v1979 = vpop.xlane.xlu0 %1978
        %v1980 = vmul.f32 %v1979, %v1757
        %v1981 = vadd.f32 %v1980, 1e-05
        %v1982 = vrsqrt.pop %v1981
        %v1983 = vmul.f32 %v1975, %v1982
        %v1985 = vlaneseq
        %v1986 = vshrl.u32 %v1985, 7
        %v1987 = vsub.s32 0, %v1986
        %v1988 = vrot.slane %v1969, %v1987
        %v1990 = vmul.f32 %v1983, %v1988
        %v1992 = vlaneseq
        %v1993 = vshrl.u32 %v1992, 7
        %v1994 = vsub.s32 0, %v1993
        %v1995 = vrot.slane %v1970, %v1994
        %v1997 = vadd.f32 %v1990, %v1995
        %1998 = vst.msk [vmem:[%s431] sm:$0xff] %vm481, %v1997
        %s1999 = sand.u32 %s313, 1
        %s2000 = scalar_lea.sflag [#allocation3], %s1999
        %s2001 = sand.u32 %s313, 1
        %s2002 = smul.addr %s2001, 8
        %s2003 = scalar_lea.vmem [#allocation2], %s2002
        // Predicated region
        $region73: #{tpu_custom_call.1} parent=71 // pred_check
          %p2004 = pneg %p323
        $region74: #{tpu_custom_call.1} parent=71 // pred_check_branch
          %2006 = sbr.rel (%p2004) target = $region76
        $region75: #{tpu_custom_call.1} parent=71 // pred_region
          %s2008 = ssub.s32 128, 128
          %2009 = vsyncadd %s2000, %s2008
          %s2010 = smul.addr %s27, 128
          %s2011 = scalar_lea.hbm %s13, %s2010
          %s2013 = sshll.u32 %s2003, 4
          %s2014 = int_to_ptr.vmem [resolvable:$true] %s2013
          %2016 = dma.vmem_to_hbm [thread:$0]  %s2014, 128, %s2011, %s2000
        $region76: #{tpu_custom_call.1} parent=71 // pred_fallthru
          _
      $region72: #{tpu_custom_call.1} parent=5 // pred_fallthru
        _
      %p2017 = scmp.le.s32.totalorder 2, %s22
      // Predicated region
      $region77: #{tpu_custom_call.1} parent=5 // pred_check
        %p2018 = pneg %p2017
      $region78: #{tpu_custom_call.1} parent=5 // pred_check_branch
        %2020 = sbr.rel (%p2018) target = $region80
      $region79: #{tpu_custom_call.1} parent=5 // pred_region
        %s2021 = ssub.s32 %s22, 2
        // Predicated region
        $region81: #{tpu_custom_call.1} parent=79 // pred_check
          %p2022 = pneg %p329
        $region82: #{tpu_custom_call.1} parent=79 // pred_check_branch
          %2024 = sbr.rel (%p2022) target = $region84
        $region83: #{tpu_custom_call.1} parent=79 // pred_region
          %s2025 = sand.u32 %s314, 1
          %s2026 = scalar_lea.sflag [#allocation3], %s2025
          %s2027 = sand.u32 %s314, 1
          %s2028 = smul.addr %s2027, 8
          %s2029 = scalar_lea.vmem [#allocation2], %s2028
          %2030 = dma.done %s2026, 128
        $region84: #{tpu_custom_call.1} parent=79 // pred_fallthru
          _
      $region80: #{tpu_custom_call.1} parent=5 // pred_fallthru
        _
    $region6: #{tpu_custom_call.1} parent=1 // loop_footer
      %s26 = sadd.s32 1, %s22
    $region7: #{tpu_custom_call.1} parent=1 // loop_footer_branch
      %21 = sbr.rel target = $region3
    $region8: #{tpu_custom_call.1} parent=1 // loop_exit
      _
    %2031 = vsyncpa [#allocation3], 1
    %s2032 = scalar_lea.sflag [#allocation3], 1
    %2033 = vsyncpa %s2032, 1

</llo_original>
